<compile_context>
chip_gen: v5e
topology: v5e:2x2
jax: 0.10.0
libtpu: 0.0.40
codegen_flags: <defaults>
</compile_context>

<pallas_src>
import math
import functools

import jax
import jax.numpy as jnp
from jax.experimental import pallas as pl
from jax.experimental.pallas import tpu as pltpu

# ----------------------------- model config ---------------------------------
VOCAB = 100
MAX_POS = 16
TYPE_VOCAB = 2
HIDDEN = 32            # "hidden_dim" (small stand-in for 768)
NUM_HEADS = 2
HEAD_DIM = HIDDEN // NUM_HEADS
NUM_LAYERS = 2
INTERMEDIATE = 64
NUM_CLASSES = 4
LN_EPS = 1e-12

BATCH = 2
SEQ = 8

# packed per-layer vector slab row indices (shape (L, 6, H))
_BO, _LN1G, _LN1B, _BO2, _LN2G, _LN2B = range(6)


# --------------------------- shared math helpers ------------------------------
def _layernorm(x, gamma, beta):
    mu = jnp.mean(x, axis=-1, keepdims=True)
    xc = x - mu
    var = jnp.mean(xc * xc, axis=-1, keepdims=True)
    return xc * jax.lax.rsqrt(var + LN_EPS) * gamma + beta


def _gelu(x):
    # TODO(synk): HF BERT uses exact erf-GELU; tanh approximation used here.
    c = math.sqrt(2.0 / math.pi)
    return 0.5 * x * (1.0 + jnp.tanh(c * (x + 0.044715 * x * x * x)))


def _vmem():
    return pl.BlockSpec(memory_space=pltpu.MemorySpace.VMEM)


# --------------------------- fused forward kernel ----------------------------
@functools.lru_cache(maxsize=None)
def _make_fused_kernel(B, S, H, num_heads, num_layers):
    dh = H // num_heads
    scale = 1.0 / math.sqrt(dh)

    def kernel(emb_ref, mask_ref, emb_ln_ref,
               wqkv_ref, bqkv_ref, wo_ref, wi_ref, wo2_ref, bvec_ref, bi_ref,
               pool_w_ref, pool_b_ref, cls_w_ref, cls_b_ref,
               o_ref):
        # Embedding LayerNorm.
        emb_ln = emb_ln_ref[...]                                      # (2, H)
        x = _layernorm(emb_ref[...], emb_ln[0:1, :], emb_ln[1:2, :])  # (B*S, H)

        # Additive attention mask, pre-shaped (B, 1, S); hoisted out of loops.
        m = mask_ref[...]

        for l in range(num_layers):                 # static loop, tiny L
            wqkv = wqkv_ref[l]                      # (H, 3H)
            bqkv = bqkv_ref[l]                      # (1, 3H)
            wo = wo_ref[l]                          # (H, H)
            wi = wi_ref[l]                          # (H, I)
            wo2 = wo2_ref[l]                        # (I, H)
            bvec = bvec_ref[l]                      # (6, H) packed vectors
            bi = bi_ref[l]                          # (1, I)

            # Fused QKV projection (single MXU pass).
            qkv = jnp.dot(x, wqkv, preferred_element_type=jnp.float32) + bqkv
            q3 = qkv[:, 0:H].reshape(B, S, H)
            k3 = qkv[:, H:2 * H].reshape(B, S, H)
            v3 = qkv[:, 2 * H:3 * H].reshape(B, S, H)

            # Attention, batched over B; static loop over heads with the
            # output projection accumulated per head (no concatenates).
            attn = jnp.zeros((B * S, H), jnp.float32)
            for h in range(num_heads):
                lo, hi = h * dh, (h + 1) * dh
                qs = q3[:, :, lo:hi]                # (B, S, dh)
                ks = k3[:, :, lo:hi]
                vs = v3[:, :, lo:hi]
                s = jnp.einsum('bqd,bkd->bqk', qs, ks,
                               preferred_element_type=jnp.float32) * scale + m
                s = s - jnp.max(s, axis=-1, keepdims=True)
                p = jnp.exp(s)
                p = p * pl.reciprocal(jnp.sum(p, axis=-1, keepdims=True),
                                      approx=True)
                ctx = jnp.einsum('bqk,bkd->bqd', p, vs,
                                 preferred_element_type=jnp.float32)  # (B,S,dh)
                attn = attn + jnp.dot(ctx.reshape(B * S, dh), wo[lo:hi, :],
                                      preferred_element_type=jnp.float32)
            attn = attn + bvec[_BO:_BO + 1, :]
            h1 = _layernorm(x + attn,
                            bvec[_LN1G:_LN1G + 1, :], bvec[_LN1B:_LN1B + 1, :])

            # Feed-forward.
            ff = jnp.dot(h1, wi, preferred_element_type=jnp.float32) + bi
            ff = _gelu(ff)
            ff = jnp.dot(ff, wo2, preferred_element_type=jnp.float32) \
                + bvec[_BO2:_BO2 + 1, :]
            x = _layernorm(h1 + ff,
                           bvec[_LN2G:_LN2G + 1, :], bvec[_LN2B:_LN2B + 1, :])

        # Pooler (first token) + classifier head.
        cls_tok = x.reshape(B, S, H)[:, 0:1, :].reshape(B, H)         # (B, H)
        pooled = jnp.tanh(
            jnp.dot(cls_tok, pool_w_ref[...],
                    preferred_element_type=jnp.float32) + pool_b_ref[...])
        o_ref[...] = jnp.dot(pooled, cls_w_ref[...],
                             preferred_element_type=jnp.float32) + cls_b_ref[...]

    return kernel


def _run_fused(emb, mask_add, p, B, S):
    kernel = _make_fused_kernel(B, S, HIDDEN, NUM_HEADS, NUM_LAYERS)
    args = (emb, mask_add, p['emb_ln'],
            p['wqkv'], p['bqkv'], p['wo'], p['wi'], p['wo2'], p['bvec'],
            p['bi'], p['pool_w'], p['pool_b'], p['cls_w'], p['cls_b'])
    return pl.pallas_call(
        kernel,
        out_shape=jax.ShapeDtypeStruct((B, NUM_CLASSES), jnp.float32),
        in_specs=[_vmem()] * len(args),
        out_specs=_vmem(),
    )(*args)


# --------------------------- parameter init ----------------------------------
def init_params(key):
    def nrm(k, shape):
        return (0.02 * jax.random.normal(k, shape)).astype(jnp.float32)

    keys = iter(jax.random.split(key, 64))
    H, I, L = HIDDEN, INTERMEDIATE, NUM_LAYERS

    wqkv, wo, wi, wo2 = [], [], [], []
    for _ in range(L):
        wq = nrm(next(keys), (H, H))
        wk = nrm(next(keys), (H, H))
        wv = nrm(next(keys), (H, H))
        wqkv.append(jnp.concatenate([wq, wk, wv], axis=1))        # (H, 3H)
        wo.append(nrm(next(keys), (H, H)))
        wi.append(nrm(next(keys), (H, I)))
        wo2.append(nrm(next(keys), (I, H)))

    zeros_h = jnp.zeros((1, H), jnp.float32)
    ones_h = jnp.ones((1, H), jnp.float32)
    # packed rows: [bo, ln1_g, ln1_b, bo2, ln2_g, ln2_b]
    bvec_layer = jnp.concatenate(
        [zeros_h, ones_h, zeros_h, zeros_h, ones_h, zeros_h], axis=0)  # (6, H)

    return {
        'word_emb': nrm(next(keys), (VOCAB, H)),
        'pos_emb': nrm(next(keys), (MAX_POS, H)),
        'type_emb': nrm(next(keys), (TYPE_VOCAB, H)),
        'emb_ln': jnp.concatenate([ones_h, zeros_h], axis=0),          # (2, H)
        'wqkv': jnp.stack(wqkv),                                       # (L,H,3H)
        'bqkv': jnp.zeros((L, 1, 3 * H), jnp.float32),
        'wo': jnp.stack(wo),                                           # (L,H,H)
        'wi': jnp.stack(wi),                                           # (L,H,I)
        'wo2': jnp.stack(wo2),                                         # (L,I,H)
        'bvec': jnp.tile(bvec_layer[None], (L, 1, 1)),                 # (L,6,H)
        'bi': jnp.zeros((L, 1, I), jnp.float32),
        'pool_w': nrm(next(keys), (H, H)),
        'pool_b': zeros_h,
        'cls_w': nrm(next(keys), (H, NUM_CLASSES)),
        'cls_b': jnp.zeros((1, NUM_CLASSES), jnp.float32),
    }


# ------------------------------ glue + forward --------------------------------
def _embed_and_mask(params, input_ids, attention_mask):
    """Embedding gather + additive-mask construction (plain-JAX glue)."""
    B, S = input_ids.shape
    H = HIDDEN
    word_e = params['word_emb'][input_ids]                     # (B,S,H)
    pos_e = params['pos_emb'][:S][None, :, :]                  # (1,S,H)
    type_e = params['type_emb'][0][None, None, :]              # token_type=0
    emb = (word_e + pos_e + type_e).reshape(B * S, H)
    mask_add = ((1.0 - attention_mask.astype(jnp.float32))
                * (-1e9))[:, None, :]                          # (B,1,S)
    return emb, mask_add


@jax.jit
def bert_wrapper_forward(params, input_ids, attention_mask):
    B, S = input_ids.shape
    emb, mask_add = _embed_and_mask(params, input_ids, attention_mask)
    return _run_fused(emb, mask_add, params, B, S)             # (B, NUM_CLASSES)


# ------------------------------ pure-JAX reference -----------------------------
def reference_forward(params, input_ids, attention_mask):
    B, S = input_ids.shape
    H, dh = HIDDEN, HEAD_DIM
    scale = 1.0 / math.sqrt(dh)

    emb, m = _embed_and_mask(params, input_ids, attention_mask)
    emb_ln = params['emb_ln']
    x = _layernorm(emb, emb_ln[0:1, :], emb_ln[1:2, :])

    for l in range(NUM_LAYERS):
        wqkv, bqkv = params['wqkv'][l], params['bqkv'][l]
        wo, wi, wo2 = params['wo'][l], params['wi'][l], params['wo2'][l]
        bvec, bi = params['bvec'][l], params['bi'][l]

        qkv = x @ wqkv + bqkv
        q3 = qkv[:, 0:H].reshape(B, S, H)
        k3 = qkv[:, H:2 * H].reshape(B, S, H)
        v3 = qkv[:, 2 * H:3 * H].reshape(B, S, H)

        attn = jnp.zeros((B * S, H), jnp.float32)
        for h in range(NUM_HEADS):
            lo, hi = h * dh, (h + 1) * dh
            s = jnp.einsum('bqd,bkd->bqk', q3[:, :, lo:hi],
                           k3[:, :, lo:hi]) * scale + m
            p = jax.nn.softmax(s, axis=-1)
            ctx = jnp.einsum('bqk,bkd->bqd', p, v3[:, :, lo:hi])
            attn = attn + ctx.reshape(B * S, dh) @ wo[lo:hi, :]
        attn = attn + bvec[_BO:_BO + 1, :]
        h1 = _layernorm(x + attn,
                        bvec[_LN1G:_LN1G + 1, :], bvec[_LN1B:_LN1B + 1, :])

        ff = _gelu(h1 @ wi + bi)
        ff = ff @ wo2 + bvec[_BO2:_BO2 + 1, :]
        x = _layernorm(h1 + ff,
                       bvec[_LN2G:_LN2G + 1, :], bvec[_LN2B:_LN2B + 1, :])

    cls_tok = x.reshape(B, S, H)[:, 0, :]
    pooled = jnp.tanh(cls_tok @ params['pool_w'] + params['pool_b'])
    return pooled @ params['cls_w'] + params['cls_b']


# -------------------------------- main ----------------------------------------
if __name__ == "__main__":
    key = jax.random.PRNGKey(0)
    k_param, k_ids = jax.random.split(key)

    params = init_params(k_param)

    input_ids = jax.random.randint(k_ids, (BATCH, SEQ), 0, VOCAB, dtype=jnp.int32)
    attention_mask = jnp.array(
        [[1] * SEQ,
         [1] * (SEQ - 2) + [0, 0]], dtype=jnp.int32)           # (B, S)

    logits = bert_wrapper_forward(params, input_ids, attention_mask)
    logits = jax.block_until_ready(logits)

    assert logits.shape == (BATCH, NUM_CLASSES)
    assert bool(jnp.all(jnp.isfinite(logits)))

    # Correctness check against a pure-JAX reference (tolerance covers the
    # approximate EUP reciprocal used for the softmax denominator).
    ref = reference_forward(params, input_ids, attention_mask)
    assert bool(jnp.allclose(logits, ref, rtol=1e-2, atol=1e-3)), \
        (logits, ref)

    print("KERNEL_OK")
</pallas_src>

<mosaic_0001>
module attributes {stable_mosaic.version = 11 : i64} {
  func.func @kernel(%arg0: memref<16x32xf32, #tpu.memory_space<vmem>>, %arg1: memref<2x1x8xf32, #tpu.memory_space<vmem>>, %arg2: memref<2x32xf32, #tpu.memory_space<vmem>>, %arg3: memref<2x32x96xf32, #tpu.memory_space<vmem>>, %arg4: memref<2x1x96xf32, #tpu.memory_space<vmem>>, %arg5: memref<2x32x32xf32, #tpu.memory_space<vmem>>, %arg6: memref<2x32x64xf32, #tpu.memory_space<vmem>>, %arg7: memref<2x64x32xf32, #tpu.memory_space<vmem>>, %arg8: memref<2x6x32xf32, #tpu.memory_space<vmem>>, %arg9: memref<2x1x64xf32, #tpu.memory_space<vmem>>, %arg10: memref<32x32xf32, #tpu.memory_space<vmem>>, %arg11: memref<1x32xf32, #tpu.memory_space<vmem>>, %arg12: memref<32x4xf32, #tpu.memory_space<vmem>>, %arg13: memref<1x4xf32, #tpu.memory_space<vmem>>, %arg14: memref<2x4xf32, #tpu.memory_space<vmem>>) attributes {dimension_semantics = [], scalar_prefetch = 0 : i64, scratch_operands = 0 : i64, tpu.core_type = #tpu.core_type<tc>} {
    %c0 = arith.constant 0 : index
    %c0_0 = arith.constant 0 : index
    %0 = vector.load %arg2[%c0, %c0_0] : memref<2x32xf32, #tpu.memory_space<vmem>>, vector<2x32xf32>
    %c0_1 = arith.constant 0 : index
    %c0_2 = arith.constant 0 : index
    %1 = vector.load %arg0[%c0_1, %c0_2] : memref<16x32xf32, #tpu.memory_space<vmem>>, vector<16x32xf32>
    %2 = vector.extract_strided_slice %0 {offsets = [0, 0], sizes = [1, 32], strides = [1, 1]} : vector<2x32xf32> to vector<1x32xf32>
    %3 = vector.extract_strided_slice %0 {offsets = [1, 0], sizes = [1, 32], strides = [1, 1]} : vector<2x32xf32> to vector<1x32xf32>
    %cst = arith.constant dense<0.000000e+00> : vector<16xf32>
    %4 = vector.multi_reduction <add>, %1, %cst [1] : vector<16x32xf32> to vector<16xf32>
    %5 = vector.shape_cast %4 : vector<16xf32> to vector<16x1xf32>
    %cst_3 = arith.constant 3.200000e+01 : f32
    %6 = vector.broadcast %cst_3 : f32 to vector<16x1xf32>
    %7 = arith.divf %5, %6 : vector<16x1xf32>
    %8 = vector.broadcast %7 : vector<16x1xf32> to vector<16x32xf32>
    %9 = arith.subf %1, %8 : vector<16x32xf32>
    %10 = arith.mulf %9, %9 : vector<16x32xf32>
    %cst_4 = arith.constant dense<0.000000e+00> : vector<16xf32>
    %11 = vector.multi_reduction <add>, %10, %cst_4 [1] : vector<16x32xf32> to vector<16xf32>
    %12 = vector.shape_cast %11 : vector<16xf32> to vector<16x1xf32>
    %cst_5 = arith.constant 3.200000e+01 : f32
    %13 = vector.broadcast %cst_5 : f32 to vector<16x1xf32>
    %14 = arith.divf %12, %13 : vector<16x1xf32>
    %cst_6 = arith.constant 9.99999996E-13 : f32
    %15 = vector.broadcast %cst_6 : f32 to vector<16x1xf32>
    %16 = arith.addf %14, %15 : vector<16x1xf32>
    %17 = math.rsqrt %16 : vector<16x1xf32>
    %18 = vector.broadcast %17 : vector<16x1xf32> to vector<16x32xf32>
    %19 = arith.mulf %9, %18 : vector<16x32xf32>
    %20 = vector.broadcast %2 : vector<1x32xf32> to vector<16x32xf32>
    %21 = arith.mulf %19, %20 : vector<16x32xf32>
    %22 = vector.broadcast %3 : vector<1x32xf32> to vector<16x32xf32>
    %23 = arith.addf %21, %22 : vector<16x32xf32>
    %c0_7 = arith.constant 0 : index
    %c0_8 = arith.constant 0 : index
    %c0_9 = arith.constant 0 : index
    %24 = vector.load %arg1[%c0_7, %c0_8, %c0_9] : memref<2x1x8xf32, #tpu.memory_space<vmem>>, vector<2x1x8xf32>
    %c0_10 = arith.constant 0 : index
    %c0_11 = arith.constant 0 : index
    %c0_12 = arith.constant 0 : index
    %25 = vector.load %arg3[%c0_10, %c0_11, %c0_12] : memref<2x32x96xf32, #tpu.memory_space<vmem>>, vector<1x32x96xf32>
    %26 = vector.shape_cast %25 : vector<1x32x96xf32> to vector<32x96xf32>
    %c0_13 = arith.constant 0 : index
    %c0_14 = arith.constant 0 : index
    %c0_15 = arith.constant 0 : index
    %27 = vector.load %arg4[%c0_13, %c0_14, %c0_15] : memref<2x1x96xf32, #tpu.memory_space<vmem>>, vector<1x1x96xf32>
    %28 = vector.shape_cast %27 : vector<1x1x96xf32> to vector<1x96xf32>
    %c0_16 = arith.constant 0 : index
    %c0_17 = arith.constant 0 : index
    %c0_18 = arith.constant 0 : index
    %29 = vector.load %arg5[%c0_16, %c0_17, %c0_18] : memref<2x32x32xf32, #tpu.memory_space<vmem>>, vector<1x32x32xf32>
    %30 = vector.shape_cast %29 : vector<1x32x32xf32> to vector<32x32xf32>
    %c0_19 = arith.constant 0 : index
    %c0_20 = arith.constant 0 : index
    %c0_21 = arith.constant 0 : index
    %31 = vector.load %arg6[%c0_19, %c0_20, %c0_21] : memref<2x32x64xf32, #tpu.memory_space<vmem>>, vector<1x32x64xf32>
    %32 = vector.shape_cast %31 : vector<1x32x64xf32> to vector<32x64xf32>
    %c0_22 = arith.constant 0 : index
    %c0_23 = arith.constant 0 : index
    %c0_24 = arith.constant 0 : index
    %33 = vector.load %arg7[%c0_22, %c0_23, %c0_24] : memref<2x64x32xf32, #tpu.memory_space<vmem>>, vector<1x64x32xf32>
    %34 = vector.shape_cast %33 : vector<1x64x32xf32> to vector<64x32xf32>
    %c0_25 = arith.constant 0 : index
    %c0_26 = arith.constant 0 : index
    %c0_27 = arith.constant 0 : index
    %35 = vector.load %arg8[%c0_25, %c0_26, %c0_27] : memref<2x6x32xf32, #tpu.memory_space<vmem>>, vector<1x6x32xf32>
    %36 = vector.shape_cast %35 : vector<1x6x32xf32> to vector<6x32xf32>
    %c0_28 = arith.constant 0 : index
    %c0_29 = arith.constant 0 : index
    %c0_30 = arith.constant 0 : index
    %37 = vector.load %arg9[%c0_28, %c0_29, %c0_30] : memref<2x1x64xf32, #tpu.memory_space<vmem>>, vector<1x1x64xf32>
    %38 = vector.shape_cast %37 : vector<1x1x64xf32> to vector<1x64xf32>
    %cst_31 = arith.constant dense<0.000000e+00> : vector<16x96xf32>
    %39 = tpu.matmul %23, %26, %cst_31 {dimension_numbers = #tpu.dot_dimension_numbers<[1], [0], [0], [1], [0, 0, 1, 1], [], []>} : vector<16x32xf32>, vector<32x96xf32>, vector<16x96xf32> -> vector<16x96xf32>
    %40 = vector.broadcast %28 : vector<1x96xf32> to vector<16x96xf32>
    %41 = arith.addf %39, %40 : vector<16x96xf32>
    %42 = vector.extract_strided_slice %41 {offsets = [0, 0], sizes = [16, 32], strides = [1, 1]} : vector<16x96xf32> to vector<16x32xf32>
    %43 = vector.shape_cast %42 : vector<16x32xf32> to vector<2x8x32xf32>
    %44 = vector.extract_strided_slice %41 {offsets = [0, 32], sizes = [16, 32], strides = [1, 1]} : vector<16x96xf32> to vector<16x32xf32>
    %45 = vector.shape_cast %44 : vector<16x32xf32> to vector<2x8x32xf32>
    %46 = vector.extract_strided_slice %41 {offsets = [0, 64], sizes = [16, 32], strides = [1, 1]} : vector<16x96xf32> to vector<16x32xf32>
    %47 = vector.shape_cast %46 : vector<16x32xf32> to vector<2x8x32xf32>
    %cst_32 = arith.constant 0.000000e+00 : f32
    %48 = vector.broadcast %cst_32 : f32 to vector<16x32xf32>
    %49 = vector.extract_strided_slice %43 {offsets = [0, 0, 0], sizes = [2, 8, 16], strides = [1, 1, 1]} : vector<2x8x32xf32> to vector<2x8x16xf32>
    %50 = vector.extract_strided_slice %45 {offsets = [0, 0, 0], sizes = [2, 8, 16], strides = [1, 1, 1]} : vector<2x8x32xf32> to vector<2x8x16xf32>
    %51 = vector.extract_strided_slice %47 {offsets = [0, 0, 0], sizes = [2, 8, 16], strides = [1, 1, 1]} : vector<2x8x32xf32> to vector<2x8x16xf32>
    "tpu.trace_start"() <{level = 10 : i32, message = "bqd,bkd->bqk"}> : () -> ()
    %cst_33 = arith.constant dense<0.000000e+00> : vector<2x8x8xf32>
    %52 = tpu.matmul %49, %50, %cst_33 {dimension_numbers = #tpu.dot_dimension_numbers<[2], [2], [1], [1], [0, 0, 0, 1, 1, 1], [0], [0]>} : vector<2x8x16xf32>, vector<2x8x16xf32>, vector<2x8x8xf32> -> vector<2x8x8xf32>
    "tpu.trace_stop"() : () -> ()
    %cst_34 = arith.constant 2.500000e-01 : f32
    %53 = vector.broadcast %cst_34 : f32 to vector<2x8x8xf32>
    %54 = arith.mulf %52, %53 : vector<2x8x8xf32>
    %55 = vector.broadcast %24 : vector<2x1x8xf32> to vector<2x8x8xf32>
    %56 = arith.addf %54, %55 : vector<2x8x8xf32>
    %cst_35 = arith.constant dense<0xFF800000> : vector<2x8xf32>
    %57 = vector.multi_reduction <maximumf>, %56, %cst_35 [2] : vector<2x8x8xf32> to vector<2x8xf32>
    %58 = vector.shape_cast %57 : vector<2x8xf32> to vector<2x8x1xf32>
    %59 = vector.broadcast %58 : vector<2x8x1xf32> to vector<2x8x8xf32>
    %60 = arith.subf %56, %59 : vector<2x8x8xf32>
    %61 = math.exp %60 : vector<2x8x8xf32>
    %cst_36 = arith.constant dense<0.000000e+00> : vector<2x8xf32>
    %62 = vector.multi_reduction <add>, %61, %cst_36 [2] : vector<2x8x8xf32> to vector<2x8xf32>
    %63 = vector.shape_cast %62 : vector<2x8xf32> to vector<2x8x1xf32>
    %64 = tpu.reciprocal %63 {approx = true} : vector<2x8x1xf32> -> vector<2x8x1xf32>
    %65 = vector.broadcast %64 : vector<2x8x1xf32> to vector<2x8x8xf32>
    %66 = arith.mulf %61, %65 : vector<2x8x8xf32>
    "tpu.trace_start"() <{level = 10 : i32, message = "bqk,bkd->bqd"}> : () -> ()
    %cst_37 = arith.constant dense<0.000000e+00> : vector<2x8x16xf32>
    %67 = tpu.matmul %66, %51, %cst_37 {dimension_numbers = #tpu.dot_dimension_numbers<[2], [1], [1], [2], [0, 0, 0, 1, 1, 2], [0], [0]>} : vector<2x8x8xf32>, vector<2x8x16xf32>, vector<2x8x16xf32> -> vector<2x8x16xf32>
    "tpu.trace_stop"() : () -> ()
    %68 = vector.shape_cast %67 : vector<2x8x16xf32> to vector<16x16xf32>
    %69 = vector.extract_strided_slice %30 {offsets = [0, 0], sizes = [16, 32], strides = [1, 1]} : vector<32x32xf32> to vector<16x32xf32>
    %cst_38 = arith.constant dense<0.000000e+00> : vector<16x32xf32>
    %70 = tpu.matmul %68, %69, %cst_38 {dimension_numbers = #tpu.dot_dimension_numbers<[1], [0], [0], [1], [0, 0, 1, 1], [], []>} : vector<16x16xf32>, vector<16x32xf32>, vector<16x32xf32> -> vector<16x32xf32>
    %71 = arith.addf %48, %70 : vector<16x32xf32>
    %72 = vector.extract_strided_slice %43 {offsets = [0, 0, 16], sizes = [2, 8, 16], strides = [1, 1, 1]} : vector<2x8x32xf32> to vector<2x8x16xf32>
    %73 = vector.extract_strided_slice %45 {offsets = [0, 0, 16], sizes = [2, 8, 16], strides = [1, 1, 1]} : vector<2x8x32xf32> to vector<2x8x16xf32>
    %74 = vector.extract_strided_slice %47 {offsets = [0, 0, 16], sizes = [2, 8, 16], strides = [1, 1, 1]} : vector<2x8x32xf32> to vector<2x8x16xf32>
    "tpu.trace_start"() <{level = 10 : i32, message = "bqd,bkd->bqk"}> : () -> ()
    %cst_39 = arith.constant dense<0.000000e+00> : vector<2x8x8xf32>
    %75 = tpu.matmul %72, %73, %cst_39 {dimension_numbers = #tpu.dot_dimension_numbers<[2], [2], [1], [1], [0, 0, 0, 1, 1, 1], [0], [0]>} : vector<2x8x16xf32>, vector<2x8x16xf32>, vector<2x8x8xf32> -> vector<2x8x8xf32>
    "tpu.trace_stop"() : () -> ()
    %cst_40 = arith.constant 2.500000e-01 : f32
    %76 = vector.broadcast %cst_40 : f32 to vector<2x8x8xf32>
    %77 = arith.mulf %75, %76 : vector<2x8x8xf32>
    %78 = vector.broadcast %24 : vector<2x1x8xf32> to vector<2x8x8xf32>
    %79 = arith.addf %77, %78 : vector<2x8x8xf32>
    %cst_41 = arith.constant dense<0xFF800000> : vector<2x8xf32>
    %80 = vector.multi_reduction <maximumf>, %79, %cst_41 [2] : vector<2x8x8xf32> to vector<2x8xf32>
    %81 = vector.shape_cast %80 : vector<2x8xf32> to vector<2x8x1xf32>
    %82 = vector.broadcast %81 : vector<2x8x1xf32> to vector<2x8x8xf32>
    %83 = arith.subf %79, %82 : vector<2x8x8xf32>
    %84 = math.exp %83 : vector<2x8x8xf32>
    %cst_42 = arith.constant dense<0.000000e+00> : vector<2x8xf32>
    %85 = vector.multi_reduction <add>, %84, %cst_42 [2] : vector<2x8x8xf32> to vector<2x8xf32>
    %86 = vector.shape_cast %85 : vector<2x8xf32> to vector<2x8x1xf32>
    %87 = tpu.reciprocal %86 {approx = true} : vector<2x8x1xf32> -> vector<2x8x1xf32>
    %88 = vector.broadcast %87 : vector<2x8x1xf32> to vector<2x8x8xf32>
    %89 = arith.mulf %84, %88 : vector<2x8x8xf32>
    "tpu.trace_start"() <{level = 10 : i32, message = "bqk,bkd->bqd"}> : () -> ()
    %cst_43 = arith.constant dense<0.000000e+00> : vector<2x8x16xf32>
    %90 = tpu.matmul %89, %74, %cst_43 {dimension_numbers = #tpu.dot_dimension_numbers<[2], [1], [1], [2], [0, 0, 0, 1, 1, 2], [0], [0]>} : vector<2x8x8xf32>, vector<2x8x16xf32>, vector<2x8x16xf32> -> vector<2x8x16xf32>
    "tpu.trace_stop"() : () -> ()
    %91 = vector.shape_cast %90 : vector<2x8x16xf32> to vector<16x16xf32>
    %92 = vector.extract_strided_slice %30 {offsets = [16, 0], sizes = [16, 32], strides = [1, 1]} : vector<32x32xf32> to vector<16x32xf32>
    %cst_44 = arith.constant dense<0.000000e+00> : vector<16x32xf32>
    %93 = tpu.matmul %91, %92, %cst_44 {dimension_numbers = #tpu.dot_dimension_numbers<[1], [0], [0], [1], [0, 0, 1, 1], [], []>} : vector<16x16xf32>, vector<16x32xf32>, vector<16x32xf32> -> vector<16x32xf32>
    %94 = arith.addf %71, %93 : vector<16x32xf32>
    %95 = vector.extract_strided_slice %36 {offsets = [0, 0], sizes = [1, 32], strides = [1, 1]} : vector<6x32xf32> to vector<1x32xf32>
    %96 = vector.broadcast %95 : vector<1x32xf32> to vector<16x32xf32>
    %97 = arith.addf %94, %96 : vector<16x32xf32>
    %98 = arith.addf %23, %97 : vector<16x32xf32>
    %99 = vector.extract_strided_slice %36 {offsets = [1, 0], sizes = [1, 32], strides = [1, 1]} : vector<6x32xf32> to vector<1x32xf32>
    %100 = vector.extract_strided_slice %36 {offsets = [2, 0], sizes = [1, 32], strides = [1, 1]} : vector<6x32xf32> to vector<1x32xf32>
    %cst_45 = arith.constant dense<0.000000e+00> : vector<16xf32>
    %101 = vector.multi_reduction <add>, %98, %cst_45 [1] : vector<16x32xf32> to vector<16xf32>
    %102 = vector.shape_cast %101 : vector<16xf32> to vector<16x1xf32>
    %cst_46 = arith.constant 3.200000e+01 : f32
    %103 = vector.broadcast %cst_46 : f32 to vector<16x1xf32>
    %104 = arith.divf %102, %103 : vector<16x1xf32>
    %105 = vector.broadcast %104 : vector<16x1xf32> to vector<16x32xf32>
    %106 = arith.subf %98, %105 : vector<16x32xf32>
    %107 = arith.mulf %106, %106 : vector<16x32xf32>
    %cst_47 = arith.constant dense<0.000000e+00> : vector<16xf32>
    %108 = vector.multi_reduction <add>, %107, %cst_47 [1] : vector<16x32xf32> to vector<16xf32>
    %109 = vector.shape_cast %108 : vector<16xf32> to vector<16x1xf32>
    %cst_48 = arith.constant 3.200000e+01 : f32
    %110 = vector.broadcast %cst_48 : f32 to vector<16x1xf32>
    %111 = arith.divf %109, %110 : vector<16x1xf32>
    %cst_49 = arith.constant 9.99999996E-13 : f32
    %112 = vector.broadcast %cst_49 : f32 to vector<16x1xf32>
    %113 = arith.addf %111, %112 : vector<16x1xf32>
    %114 = math.rsqrt %113 : vector<16x1xf32>
    %115 = vector.broadcast %114 : vector<16x1xf32> to vector<16x32xf32>
    %116 = arith.mulf %106, %115 : vector<16x32xf32>
    %117 = vector.broadcast %99 : vector<1x32xf32> to vector<16x32xf32>
    %118 = arith.mulf %116, %117 : vector<16x32xf32>
    %119 = vector.broadcast %100 : vector<1x32xf32> to vector<16x32xf32>
    %120 = arith.addf %118, %119 : vector<16x32xf32>
    %cst_50 = arith.constant dense<0.000000e+00> : vector<16x64xf32>
    %121 = tpu.matmul %120, %32, %cst_50 {dimension_numbers = #tpu.dot_dimension_numbers<[1], [0], [0], [1], [0, 0, 1, 1], [], []>} : vector<16x32xf32>, vector<32x64xf32>, vector<16x64xf32> -> vector<16x64xf32>
    %122 = vector.broadcast %38 : vector<1x64xf32> to vector<16x64xf32>
    %123 = arith.addf %121, %122 : vector<16x64xf32>
    %cst_51 = arith.constant 5.000000e-01 : f32
    %124 = vector.broadcast %cst_51 : f32 to vector<16x64xf32>
    %125 = arith.mulf %124, %123 : vector<16x64xf32>
    %cst_52 = arith.constant 4.471500e-02 : f32
    %126 = vector.broadcast %cst_52 : f32 to vector<16x64xf32>
    %127 = arith.mulf %126, %123 : vector<16x64xf32>
    %128 = arith.mulf %127, %123 : vector<16x64xf32>
    %129 = arith.mulf %128, %123 : vector<16x64xf32>
    %130 = arith.addf %123, %129 : vector<16x64xf32>
    %cst_53 = arith.constant 0.797884583 : f32
    %131 = vector.broadcast %cst_53 : f32 to vector<16x64xf32>
    %132 = arith.mulf %131, %130 : vector<16x64xf32>
    %133 = math.tanh %132 : vector<16x64xf32>
    %cst_54 = arith.constant 1.000000e+00 : f32
    %134 = vector.broadcast %cst_54 : f32 to vector<16x64xf32>
    %135 = arith.addf %134, %133 : vector<16x64xf32>
    %136 = arith.mulf %125, %135 : vector<16x64xf32>
    %cst_55 = arith.constant dense<0.000000e+00> : vector<16x32xf32>
    %137 = tpu.matmul %136, %34, %cst_55 {dimension_numbers = #tpu.dot_dimension_numbers<[1], [0], [0], [1], [0, 0, 1, 1], [], []>} : vector<16x64xf32>, vector<64x32xf32>, vector<16x32xf32> -> vector<16x32xf32>
    %138 = vector.extract_strided_slice %36 {offsets = [3, 0], sizes = [1, 32], strides = [1, 1]} : vector<6x32xf32> to vector<1x32xf32>
    %139 = vector.broadcast %138 : vector<1x32xf32> to vector<16x32xf32>
    %140 = arith.addf %137, %139 : vector<16x32xf32>
    %141 = arith.addf %120, %140 : vector<16x32xf32>
    %142 = vector.extract_strided_slice %36 {offsets = [4, 0], sizes = [1, 32], strides = [1, 1]} : vector<6x32xf32> to vector<1x32xf32>
    %143 = vector.extract_strided_slice %36 {offsets = [5, 0], sizes = [1, 32], strides = [1, 1]} : vector<6x32xf32> to vector<1x32xf32>
    %cst_56 = arith.constant dense<0.000000e+00> : vector<16xf32>
    %144 = vector.multi_reduction <add>, %141, %cst_56 [1] : vector<16x32xf32> to vector<16xf32>
    %145 = vector.shape_cast %144 : vector<16xf32> to vector<16x1xf32>
    %cst_57 = arith.constant 3.200000e+01 : f32
    %146 = vector.broadcast %cst_57 : f32 to vector<16x1xf32>
    %147 = arith.divf %145, %146 : vector<16x1xf32>
    %148 = vector.broadcast %147 : vector<16x1xf32> to vector<16x32xf32>
    %149 = arith.subf %141, %148 : vector<16x32xf32>
    %150 = arith.mulf %149, %149 : vector<16x32xf32>
    %cst_58 = arith.constant dense<0.000000e+00> : vector<16xf32>
    %151 = vector.multi_reduction <add>, %150, %cst_58 [1] : vector<16x32xf32> to vector<16xf32>
    %152 = vector.shape_cast %151 : vector<16xf32> to vector<16x1xf32>
    %cst_59 = arith.constant 3.200000e+01 : f32
    %153 = vector.broadcast %cst_59 : f32 to vector<16x1xf32>
    %154 = arith.divf %152, %153 : vector<16x1xf32>
    %cst_60 = arith.constant 9.99999996E-13 : f32
    %155 = vector.broadcast %cst_60 : f32 to vector<16x1xf32>
    %156 = arith.addf %154, %155 : vector<16x1xf32>
    %157 = math.rsqrt %156 : vector<16x1xf32>
    %158 = vector.broadcast %157 : vector<16x1xf32> to vector<16x32xf32>
    %159 = arith.mulf %149, %158 : vector<16x32xf32>
    %160 = vector.broadcast %142 : vector<1x32xf32> to vector<16x32xf32>
    %161 = arith.mulf %159, %160 : vector<16x32xf32>
    %162 = vector.broadcast %143 : vector<1x32xf32> to vector<16x32xf32>
    %163 = arith.addf %161, %162 : vector<16x32xf32>
    %c1 = arith.constant 1 : index
    %c0_61 = arith.constant 0 : index
    %c0_62 = arith.constant 0 : index
    %164 = vector.load %arg3[%c1, %c0_61, %c0_62] : memref<2x32x96xf32, #tpu.memory_space<vmem>>, vector<1x32x96xf32>
    %165 = vector.shape_cast %164 : vector<1x32x96xf32> to vector<32x96xf32>
    %c1_63 = arith.constant 1 : index
    %c0_64 = arith.constant 0 : index
    %c0_65 = arith.constant 0 : index
    %166 = vector.load %arg4[%c1_63, %c0_64, %c0_65] : memref<2x1x96xf32, #tpu.memory_space<vmem>>, vector<1x1x96xf32>
    %167 = vector.shape_cast %166 : vector<1x1x96xf32> to vector<1x96xf32>
    %c1_66 = arith.constant 1 : index
    %c0_67 = arith.constant 0 : index
    %c0_68 = arith.constant 0 : index
    %168 = vector.load %arg5[%c1_66, %c0_67, %c0_68] : memref<2x32x32xf32, #tpu.memory_space<vmem>>, vector<1x32x32xf32>
    %169 = vector.shape_cast %168 : vector<1x32x32xf32> to vector<32x32xf32>
    %c1_69 = arith.constant 1 : index
    %c0_70 = arith.constant 0 : index
    %c0_71 = arith.constant 0 : index
    %170 = vector.load %arg6[%c1_69, %c0_70, %c0_71] : memref<2x32x64xf32, #tpu.memory_space<vmem>>, vector<1x32x64xf32>
    %171 = vector.shape_cast %170 : vector<1x32x64xf32> to vector<32x64xf32>
    %c1_72 = arith.constant 1 : index
    %c0_73 = arith.constant 0 : index
    %c0_74 = arith.constant 0 : index
    %172 = vector.load %arg7[%c1_72, %c0_73, %c0_74] : memref<2x64x32xf32, #tpu.memory_space<vmem>>, vector<1x64x32xf32>
    %173 = vector.shape_cast %172 : vector<1x64x32xf32> to vector<64x32xf32>
    %c1_75 = arith.constant 1 : index
    %c0_76 = arith.constant 0 : index
    %c0_77 = arith.constant 0 : index
    %174 = vector.load %arg8[%c1_75, %c0_76, %c0_77] : memref<2x6x32xf32, #tpu.memory_space<vmem>>, vector<1x6x32xf32>
    %175 = vector.shape_cast %174 : vector<1x6x32xf32> to vector<6x32xf32>
    %c1_78 = arith.constant 1 : index
    %c0_79 = arith.constant 0 : index
    %c0_80 = arith.constant 0 : index
    %176 = vector.load %arg9[%c1_78, %c0_79, %c0_80] : memref<2x1x64xf32, #tpu.memory_space<vmem>>, vector<1x1x64xf32>
    %177 = vector.shape_cast %176 : vector<1x1x64xf32> to vector<1x64xf32>
    %cst_81 = arith.constant dense<0.000000e+00> : vector<16x96xf32>
    %178 = tpu.matmul %163, %165, %cst_81 {dimension_numbers = #tpu.dot_dimension_numbers<[1], [0], [0], [1], [0, 0, 1, 1], [], []>} : vector<16x32xf32>, vector<32x96xf32>, vector<16x96xf32> -> vector<16x96xf32>
    %179 = vector.broadcast %167 : vector<1x96xf32> to vector<16x96xf32>
    %180 = arith.addf %178, %179 : vector<16x96xf32>
    %181 = vector.extract_strided_slice %180 {offsets = [0, 0], sizes = [16, 32], strides = [1, 1]} : vector<16x96xf32> to vector<16x32xf32>
    %182 = vector.shape_cast %181 : vector<16x32xf32> to vector<2x8x32xf32>
    %183 = vector.extract_strided_slice %180 {offsets = [0, 32], sizes = [16, 32], strides = [1, 1]} : vector<16x96xf32> to vector<16x32xf32>
    %184 = vector.shape_cast %183 : vector<16x32xf32> to vector<2x8x32xf32>
    %185 = vector.extract_strided_slice %180 {offsets = [0, 64], sizes = [16, 32], strides = [1, 1]} : vector<16x96xf32> to vector<16x32xf32>
    %186 = vector.shape_cast %185 : vector<16x32xf32> to vector<2x8x32xf32>
    %cst_82 = arith.constant 0.000000e+00 : f32
    %187 = vector.broadcast %cst_82 : f32 to vector<16x32xf32>
    %188 = vector.extract_strided_slice %182 {offsets = [0, 0, 0], sizes = [2, 8, 16], strides = [1, 1, 1]} : vector<2x8x32xf32> to vector<2x8x16xf32>
    %189 = vector.extract_strided_slice %184 {offsets = [0, 0, 0], sizes = [2, 8, 16], strides = [1, 1, 1]} : vector<2x8x32xf32> to vector<2x8x16xf32>
    %190 = vector.extract_strided_slice %186 {offsets = [0, 0, 0], sizes = [2, 8, 16], strides = [1, 1, 1]} : vector<2x8x32xf32> to vector<2x8x16xf32>
    "tpu.trace_start"() <{level = 10 : i32, message = "bqd,bkd->bqk"}> : () -> ()
    %cst_83 = arith.constant dense<0.000000e+00> : vector<2x8x8xf32>
    %191 = tpu.matmul %188, %189, %cst_83 {dimension_numbers = #tpu.dot_dimension_numbers<[2], [2], [1], [1], [0, 0, 0, 1, 1, 1], [0], [0]>} : vector<2x8x16xf32>, vector<2x8x16xf32>, vector<2x8x8xf32> -> vector<2x8x8xf32>
    "tpu.trace_stop"() : () -> ()
    %cst_84 = arith.constant 2.500000e-01 : f32
    %192 = vector.broadcast %cst_84 : f32 to vector<2x8x8xf32>
    %193 = arith.mulf %191, %192 : vector<2x8x8xf32>
    %194 = vector.broadcast %24 : vector<2x1x8xf32> to vector<2x8x8xf32>
    %195 = arith.addf %193, %194 : vector<2x8x8xf32>
    %cst_85 = arith.constant dense<0xFF800000> : vector<2x8xf32>
    %196 = vector.multi_reduction <maximumf>, %195, %cst_85 [2] : vector<2x8x8xf32> to vector<2x8xf32>
    %197 = vector.shape_cast %196 : vector<2x8xf32> to vector<2x8x1xf32>
    %198 = vector.broadcast %197 : vector<2x8x1xf32> to vector<2x8x8xf32>
    %199 = arith.subf %195, %198 : vector<2x8x8xf32>
    %200 = math.exp %199 : vector<2x8x8xf32>
    %cst_86 = arith.constant dense<0.000000e+00> : vector<2x8xf32>
    %201 = vector.multi_reduction <add>, %200, %cst_86 [2] : vector<2x8x8xf32> to vector<2x8xf32>
    %202 = vector.shape_cast %201 : vector<2x8xf32> to vector<2x8x1xf32>
    %203 = tpu.reciprocal %202 {approx = true} : vector<2x8x1xf32> -> vector<2x8x1xf32>
    %204 = vector.broadcast %203 : vector<2x8x1xf32> to vector<2x8x8xf32>
    %205 = arith.mulf %200, %204 : vector<2x8x8xf32>
    "tpu.trace_start"() <{level = 10 : i32, message = "bqk,bkd->bqd"}> : () -> ()
    %cst_87 = arith.constant dense<0.000000e+00> : vector<2x8x16xf32>
    %206 = tpu.matmul %205, %190, %cst_87 {dimension_numbers = #tpu.dot_dimension_numbers<[2], [1], [1], [2], [0, 0, 0, 1, 1, 2], [0], [0]>} : vector<2x8x8xf32>, vector<2x8x16xf32>, vector<2x8x16xf32> -> vector<2x8x16xf32>
    "tpu.trace_stop"() : () -> ()
    %207 = vector.shape_cast %206 : vector<2x8x16xf32> to vector<16x16xf32>
    %208 = vector.extract_strided_slice %169 {offsets = [0, 0], sizes = [16, 32], strides = [1, 1]} : vector<32x32xf32> to vector<16x32xf32>
    %cst_88 = arith.constant dense<0.000000e+00> : vector<16x32xf32>
    %209 = tpu.matmul %207, %208, %cst_88 {dimension_numbers = #tpu.dot_dimension_numbers<[1], [0], [0], [1], [0, 0, 1, 1], [], []>} : vector<16x16xf32>, vector<16x32xf32>, vector<16x32xf32> -> vector<16x32xf32>
    %210 = arith.addf %187, %209 : vector<16x32xf32>
    %211 = vector.extract_strided_slice %182 {offsets = [0, 0, 16], sizes = [2, 8, 16], strides = [1, 1, 1]} : vector<2x8x32xf32> to vector<2x8x16xf32>
    %212 = vector.extract_strided_slice %184 {offsets = [0, 0, 16], sizes = [2, 8, 16], strides = [1, 1, 1]} : vector<2x8x32xf32> to vector<2x8x16xf32>
    %213 = vector.extract_strided_slice %186 {offsets = [0, 0, 16], sizes = [2, 8, 16], strides = [1, 1, 1]} : vector<2x8x32xf32> to vector<2x8x16xf32>
    "tpu.trace_start"() <{level = 10 : i32, message = "bqd,bkd->bqk"}> : () -> ()
    %cst_89 = arith.constant dense<0.000000e+00> : vector<2x8x8xf32>
    %214 = tpu.matmul %211, %212, %cst_89 {dimension_numbers = #tpu.dot_dimension_numbers<[2], [2], [1], [1], [0, 0, 0, 1, 1, 1], [0], [0]>} : vector<2x8x16xf32>, vector<2x8x16xf32>, vector<2x8x8xf32> -> vector<2x8x8xf32>
    "tpu.trace_stop"() : () -> ()
    %cst_90 = arith.constant 2.500000e-01 : f32
    %215 = vector.broadcast %cst_90 : f32 to vector<2x8x8xf32>
    %216 = arith.mulf %214, %215 : vector<2x8x8xf32>
    %217 = vector.broadcast %24 : vector<2x1x8xf32> to vector<2x8x8xf32>
    %218 = arith.addf %216, %217 : vector<2x8x8xf32>
    %cst_91 = arith.constant dense<0xFF800000> : vector<2x8xf32>
    %219 = vector.multi_reduction <maximumf>, %218, %cst_91 [2] : vector<2x8x8xf32> to vector<2x8xf32>
    %220 = vector.shape_cast %219 : vector<2x8xf32> to vector<2x8x1xf32>
    %221 = vector.broadcast %220 : vector<2x8x1xf32> to vector<2x8x8xf32>
    %222 = arith.subf %218, %221 : vector<2x8x8xf32>
    %223 = math.exp %222 : vector<2x8x8xf32>
    %cst_92 = arith.constant dense<0.000000e+00> : vector<2x8xf32>
    %224 = vector.multi_reduction <add>, %223, %cst_92 [2] : vector<2x8x8xf32> to vector<2x8xf32>
    %225 = vector.shape_cast %224 : vector<2x8xf32> to vector<2x8x1xf32>
    %226 = tpu.reciprocal %225 {approx = true} : vector<2x8x1xf32> -> vector<2x8x1xf32>
    %227 = vector.broadcast %226 : vector<2x8x1xf32> to vector<2x8x8xf32>
    %228 = arith.mulf %223, %227 : vector<2x8x8xf32>
    "tpu.trace_start"() <{level = 10 : i32, message = "bqk,bkd->bqd"}> : () -> ()
    %cst_93 = arith.constant dense<0.000000e+00> : vector<2x8x16xf32>
    %229 = tpu.matmul %228, %213, %cst_93 {dimension_numbers = #tpu.dot_dimension_numbers<[2], [1], [1], [2], [0, 0, 0, 1, 1, 2], [0], [0]>} : vector<2x8x8xf32>, vector<2x8x16xf32>, vector<2x8x16xf32> -> vector<2x8x16xf32>
    "tpu.trace_stop"() : () -> ()
    %230 = vector.shape_cast %229 : vector<2x8x16xf32> to vector<16x16xf32>
    %231 = vector.extract_strided_slice %169 {offsets = [16, 0], sizes = [16, 32], strides = [1, 1]} : vector<32x32xf32> to vector<16x32xf32>
    %cst_94 = arith.constant dense<0.000000e+00> : vector<16x32xf32>
    %232 = tpu.matmul %230, %231, %cst_94 {dimension_numbers = #tpu.dot_dimension_numbers<[1], [0], [0], [1], [0, 0, 1, 1], [], []>} : vector<16x16xf32>, vector<16x32xf32>, vector<16x32xf32> -> vector<16x32xf32>
    %233 = arith.addf %210, %232 : vector<16x32xf32>
    %234 = vector.extract_strided_slice %175 {offsets = [0, 0], sizes = [1, 32], strides = [1, 1]} : vector<6x32xf32> to vector<1x32xf32>
    %235 = vector.broadcast %234 : vector<1x32xf32> to vector<16x32xf32>
    %236 = arith.addf %233, %235 : vector<16x32xf32>
    %237 = arith.addf %163, %236 : vector<16x32xf32>
    %238 = vector.extract_strided_slice %175 {offsets = [1, 0], sizes = [1, 32], strides = [1, 1]} : vector<6x32xf32> to vector<1x32xf32>
    %239 = vector.extract_strided_slice %175 {offsets = [2, 0], sizes = [1, 32], strides = [1, 1]} : vector<6x32xf32> to vector<1x32xf32>
    %cst_95 = arith.constant dense<0.000000e+00> : vector<16xf32>
    %240 = vector.multi_reduction <add>, %237, %cst_95 [1] : vector<16x32xf32> to vector<16xf32>
    %241 = vector.shape_cast %240 : vector<16xf32> to vector<16x1xf32>
    %cst_96 = arith.constant 3.200000e+01 : f32
    %242 = vector.broadcast %cst_96 : f32 to vector<16x1xf32>
    %243 = arith.divf %241, %242 : vector<16x1xf32>
    %244 = vector.broadcast %243 : vector<16x1xf32> to vector<16x32xf32>
    %245 = arith.subf %237, %244 : vector<16x32xf32>
    %246 = arith.mulf %245, %245 : vector<16x32xf32>
    %cst_97 = arith.constant dense<0.000000e+00> : vector<16xf32>
    %247 = vector.multi_reduction <add>, %246, %cst_97 [1] : vector<16x32xf32> to vector<16xf32>
    %248 = vector.shape_cast %247 : vector<16xf32> to vector<16x1xf32>
    %cst_98 = arith.constant 3.200000e+01 : f32
    %249 = vector.broadcast %cst_98 : f32 to vector<16x1xf32>
    %250 = arith.divf %248, %249 : vector<16x1xf32>
    %cst_99 = arith.constant 9.99999996E-13 : f32
    %251 = vector.broadcast %cst_99 : f32 to vector<16x1xf32>
    %252 = arith.addf %250, %251 : vector<16x1xf32>
    %253 = math.rsqrt %252 : vector<16x1xf32>
    %254 = vector.broadcast %253 : vector<16x1xf32> to vector<16x32xf32>
    %255 = arith.mulf %245, %254 : vector<16x32xf32>
    %256 = vector.broadcast %238 : vector<1x32xf32> to vector<16x32xf32>
    %257 = arith.mulf %255, %256 : vector<16x32xf32>
    %258 = vector.broadcast %239 : vector<1x32xf32> to vector<16x32xf32>
    %259 = arith.addf %257, %258 : vector<16x32xf32>
    %cst_100 = arith.constant dense<0.000000e+00> : vector<16x64xf32>
    %260 = tpu.matmul %259, %171, %cst_100 {dimension_numbers = #tpu.dot_dimension_numbers<[1], [0], [0], [1], [0, 0, 1, 1], [], []>} : vector<16x32xf32>, vector<32x64xf32>, vector<16x64xf32> -> vector<16x64xf32>
    %261 = vector.broadcast %177 : vector<1x64xf32> to vector<16x64xf32>
    %262 = arith.addf %260, %261 : vector<16x64xf32>
    %cst_101 = arith.constant 5.000000e-01 : f32
    %263 = vector.broadcast %cst_101 : f32 to vector<16x64xf32>
    %264 = arith.mulf %263, %262 : vector<16x64xf32>
    %cst_102 = arith.constant 4.471500e-02 : f32
    %265 = vector.broadcast %cst_102 : f32 to vector<16x64xf32>
    %266 = arith.mulf %265, %262 : vector<16x64xf32>
    %267 = arith.mulf %266, %262 : vector<16x64xf32>
    %268 = arith.mulf %267, %262 : vector<16x64xf32>
    %269 = arith.addf %262, %268 : vector<16x64xf32>
    %cst_103 = arith.constant 0.797884583 : f32
    %270 = vector.broadcast %cst_103 : f32 to vector<16x64xf32>
    %271 = arith.mulf %270, %269 : vector<16x64xf32>
    %272 = math.tanh %271 : vector<16x64xf32>
    %cst_104 = arith.constant 1.000000e+00 : f32
    %273 = vector.broadcast %cst_104 : f32 to vector<16x64xf32>
    %274 = arith.addf %273, %272 : vector<16x64xf32>
    %275 = arith.mulf %264, %274 : vector<16x64xf32>
    %cst_105 = arith.constant dense<0.000000e+00> : vector<16x32xf32>
    %276 = tpu.matmul %275, %173, %cst_105 {dimension_numbers = #tpu.dot_dimension_numbers<[1], [0], [0], [1], [0, 0, 1, 1], [], []>} : vector<16x64xf32>, vector<64x32xf32>, vector<16x32xf32> -> vector<16x32xf32>
    %277 = vector.extract_strided_slice %175 {offsets = [3, 0], sizes = [1, 32], strides = [1, 1]} : vector<6x32xf32> to vector<1x32xf32>
    %278 = vector.broadcast %277 : vector<1x32xf32> to vector<16x32xf32>
    %279 = arith.addf %276, %278 : vector<16x32xf32>
    %280 = arith.addf %259, %279 : vector<16x32xf32>
    %281 = vector.extract_strided_slice %175 {offsets = [4, 0], sizes = [1, 32], strides = [1, 1]} : vector<6x32xf32> to vector<1x32xf32>
    %282 = vector.extract_strided_slice %175 {offsets = [5, 0], sizes = [1, 32], strides = [1, 1]} : vector<6x32xf32> to vector<1x32xf32>
    %cst_106 = arith.constant dense<0.000000e+00> : vector<16xf32>
    %283 = vector.multi_reduction <add>, %280, %cst_106 [1] : vector<16x32xf32> to vector<16xf32>
    %284 = vector.shape_cast %283 : vector<16xf32> to vector<16x1xf32>
    %cst_107 = arith.constant 3.200000e+01 : f32
    %285 = vector.broadcast %cst_107 : f32 to vector<16x1xf32>
    %286 = arith.divf %284, %285 : vector<16x1xf32>
    %287 = vector.broadcast %286 : vector<16x1xf32> to vector<16x32xf32>
    %288 = arith.subf %280, %287 : vector<16x32xf32>
    %289 = arith.mulf %288, %288 : vector<16x32xf32>
    %cst_108 = arith.constant dense<0.000000e+00> : vector<16xf32>
    %290 = vector.multi_reduction <add>, %289, %cst_108 [1] : vector<16x32xf32> to vector<16xf32>
    %291 = vector.shape_cast %290 : vector<16xf32> to vector<16x1xf32>
    %cst_109 = arith.constant 3.200000e+01 : f32
    %292 = vector.broadcast %cst_109 : f32 to vector<16x1xf32>
    %293 = arith.divf %291, %292 : vector<16x1xf32>
    %cst_110 = arith.constant 9.99999996E-13 : f32
    %294 = vector.broadcast %cst_110 : f32 to vector<16x1xf32>
    %295 = arith.addf %293, %294 : vector<16x1xf32>
    %296 = math.rsqrt %295 : vector<16x1xf32>
    %297 = vector.broadcast %296 : vector<16x1xf32> to vector<16x32xf32>
    %298 = arith.mulf %288, %297 : vector<16x32xf32>
    %299 = vector.broadcast %281 : vector<1x32xf32> to vector<16x32xf32>
    %300 = arith.mulf %298, %299 : vector<16x32xf32>
    %301 = vector.broadcast %282 : vector<1x32xf32> to vector<16x32xf32>
    %302 = arith.addf %300, %301 : vector<16x32xf32>
    %303 = vector.shape_cast %302 : vector<16x32xf32> to vector<2x8x32xf32>
    %304 = vector.extract_strided_slice %303 {offsets = [0, 0, 0], sizes = [2, 1, 32], strides = [1, 1, 1]} : vector<2x8x32xf32> to vector<2x1x32xf32>
    %305 = vector.shape_cast %304 : vector<2x1x32xf32> to vector<2x32xf32>
    %c0_111 = arith.constant 0 : index
    %c0_112 = arith.constant 0 : index
    %306 = vector.load %arg10[%c0_111, %c0_112] : memref<32x32xf32, #tpu.memory_space<vmem>>, vector<32x32xf32>
    %cst_113 = arith.constant dense<0.000000e+00> : vector<2x32xf32>
    %307 = tpu.matmul %305, %306, %cst_113 {dimension_numbers = #tpu.dot_dimension_numbers<[1], [0], [0], [1], [0, 0, 1, 1], [], []>} : vector<2x32xf32>, vector<32x32xf32>, vector<2x32xf32> -> vector<2x32xf32>
    %c0_114 = arith.constant 0 : index
    %c0_115 = arith.constant 0 : index
    %308 = vector.load %arg11[%c0_114, %c0_115] : memref<1x32xf32, #tpu.memory_space<vmem>>, vector<1x32xf32>
    %309 = vector.broadcast %308 : vector<1x32xf32> to vector<2x32xf32>
    %310 = arith.addf %307, %309 : vector<2x32xf32>
    %311 = math.tanh %310 : vector<2x32xf32>
    %c0_116 = arith.constant 0 : index
    %c0_117 = arith.constant 0 : index
    %312 = vector.load %arg12[%c0_116, %c0_117] : memref<32x4xf32, #tpu.memory_space<vmem>>, vector<32x4xf32>
    %cst_118 = arith.constant dense<0.000000e+00> : vector<2x4xf32>
    %313 = tpu.matmul %311, %312, %cst_118 {dimension_numbers = #tpu.dot_dimension_numbers<[1], [0], [0], [1], [0, 0, 1, 1], [], []>} : vector<2x32xf32>, vector<32x4xf32>, vector<2x4xf32> -> vector<2x4xf32>
    %c0_119 = arith.constant 0 : index
    %c0_120 = arith.constant 0 : index
    %314 = vector.load %arg13[%c0_119, %c0_120] : memref<1x4xf32, #tpu.memory_space<vmem>>, vector<1x4xf32>
    %315 = vector.broadcast %314 : vector<1x4xf32> to vector<2x4xf32>
    %316 = arith.addf %313, %315 : vector<2x4xf32>
    %c0_121 = arith.constant 0 : index
    %c0_122 = arith.constant 0 : index
    %317 = vector.load %arg14[%c0_121, %c0_122] : memref<2x4xf32, #tpu.memory_space<vmem>>, vector<2x4xf32>
    tpu.vector_store %arg14[%c0_121, %c0_122], %316 {strides = array<i32>} : memref<2x4xf32, #tpu.memory_space<vmem>>, vector<2x4xf32>,
    return
  }
}

</mosaic_0001>

<llo_original>
// kernel: bert_wrapper_forward.1
$region0: #{bert_wrapper_forward.1}
  #allocation0 [shape = 'u32[]', space=smem, size = 0x4, offset = 0x4, fixed_abs, tag = 'smem constant byte address 0x4 - core index']
  #allocation1 [shape = 'u32[72,128]{1,0:T(1,128)}', space=vmem, size = 0x9000, scoped, tag = 'internal scratch']
  %s0 = inlined_call_operand.vmem [shape: f32[16,32], index: 0, kind: input, shape index: {}]
  %s1 = inlined_call_operand.vmem [shape: f32[2,1,8], index: 1, kind: input, shape index: {}]
  %s2 = inlined_call_operand.vmem [shape: f32[2,32], index: 2, kind: input, shape index: {}]
  %s3 = inlined_call_operand.vmem [shape: f32[2,32,96], index: 3, kind: input, shape index: {}]
  %s4 = inlined_call_operand.vmem [shape: f32[2,1,96], index: 4, kind: input, shape index: {}]
  %s5 = inlined_call_operand.vmem [shape: f32[2,32,32], index: 5, kind: input, shape index: {}]
  %s6 = inlined_call_operand.vmem [shape: f32[2,32,64], index: 6, kind: input, shape index: {}]
  %s7 = inlined_call_operand.vmem [shape: f32[2,64,32], index: 7, kind: input, shape index: {}]
  %s8 = inlined_call_operand.vmem [shape: f32[2,6,32], index: 8, kind: input, shape index: {}]
  %s9 = inlined_call_operand.vmem [shape: f32[2,1,64], index: 9, kind: input, shape index: {}]
  %s10 = inlined_call_operand.vmem [shape: f32[32,32], index: 10, kind: input, shape index: {}]
  %s11 = inlined_call_operand.vmem [shape: f32[1,32], index: 11, kind: input, shape index: {}]
  %s12 = inlined_call_operand.vmem [shape: f32[32,4], index: 12, kind: input, shape index: {}]
  %s13 = inlined_call_operand.vmem [shape: f32[1,4], index: 13, kind: input, shape index: {}]
  %s14 = inlined_call_operand.hbm [shape: f32[2,4], index: 14, kind: output, shape index: {}]
  %s15 = sld [smem:[#allocation0]]
  $region66: #{bert_wrapper_forward.1} parent=0
    _
  %s17 = ssub.s32 1, %s15
  %s18 = scalar_select 0, %s17, %s15
  $region1: #{bert_wrapper_forward.1} parent=0
    #allocation2 [shape = 'u8[1024]{0}', space=vmem, size = 0x400, scoped, tag = 'output window, operand 0, single buffered']
    #allocation3 [shape = 's32[1]{0}', space=sflag, size = 0x4, scoped, tag = 'scoped memory for bert_wrapper_forward.1']
    %19 = vsyncpa [#allocation3], 0
    // Predicated region
    $region2: #{bert_wrapper_forward.1} parent=1 // pred_check
      _
    $region3: #{bert_wrapper_forward.1} parent=1 // pred_check_branch
      %21 = sbr.rel (0) target = $region5
    $region4: #{bert_wrapper_forward.1} parent=1 // pred_region
      _
    $region5: #{bert_wrapper_forward.1} parent=1 // pred_fallthru
      _
    // Predicated region
    $region6: #{bert_wrapper_forward.1} parent=1 // pred_check
      _
    $region7: #{bert_wrapper_forward.1} parent=1 // pred_check_branch
      %23 = sbr.rel (0) target = $region9
    $region8: #{bert_wrapper_forward.1} parent=1 // pred_region
      _
    $region9: #{bert_wrapper_forward.1} parent=1 // pred_fallthru
      _
    // Predicated region
    $region10: #{bert_wrapper_forward.1} parent=1 // pred_check
      _
    $region11: #{bert_wrapper_forward.1} parent=1 // pred_check_branch
      %25 = sbr.rel (0) target = $region13
    $region12: #{bert_wrapper_forward.1} parent=1 // pred_region
      _
    $region13: #{bert_wrapper_forward.1} parent=1 // pred_fallthru
      _
    // Predicated region
    $region14: #{bert_wrapper_forward.1} parent=1 // pred_check
      _
    $region15: #{bert_wrapper_forward.1} parent=1 // pred_check_branch
      %27 = sbr.rel (0) target = $region17
    $region16: #{bert_wrapper_forward.1} parent=1 // pred_region
      _
    $region17: #{bert_wrapper_forward.1} parent=1 // pred_fallthru
      _
    // Predicated region
    $region18: #{bert_wrapper_forward.1} parent=1 // pred_check
      _
    $region19: #{bert_wrapper_forward.1} parent=1 // pred_check_branch
      %29 = sbr.rel (0) target = $region21
    $region20: #{bert_wrapper_forward.1} parent=1 // pred_region
      _
    $region21: #{bert_wrapper_forward.1} parent=1 // pred_fallthru
      _
    // Predicated region
    $region22: #{bert_wrapper_forward.1} parent=1 // pred_check
      _
    $region23: #{bert_wrapper_forward.1} parent=1 // pred_check_branch
      %31 = sbr.rel (0) target = $region25
    $region24: #{bert_wrapper_forward.1} parent=1 // pred_region
      _
    $region25: #{bert_wrapper_forward.1} parent=1 // pred_fallthru
      _
    // Predicated region
    $region26: #{bert_wrapper_forward.1} parent=1 // pred_check
      _
    $region27: #{bert_wrapper_forward.1} parent=1 // pred_check_branch
      %33 = sbr.rel (0) target = $region29
    $region28: #{bert_wrapper_forward.1} parent=1 // pred_region
      _
    $region29: #{bert_wrapper_forward.1} parent=1 // pred_fallthru
      _
    // Predicated region
    $region30: #{bert_wrapper_forward.1} parent=1 // pred_check
      _
    $region31: #{bert_wrapper_forward.1} parent=1 // pred_check_branch
      %35 = sbr.rel (0) target = $region33
    $region32: #{bert_wrapper_forward.1} parent=1 // pred_region
      _
    $region33: #{bert_wrapper_forward.1} parent=1 // pred_fallthru
      _
    // Predicated region
    $region34: #{bert_wrapper_forward.1} parent=1 // pred_check
      _
    $region35: #{bert_wrapper_forward.1} parent=1 // pred_check_branch
      %37 = sbr.rel (0) target = $region37
    $region36: #{bert_wrapper_forward.1} parent=1 // pred_region
      _
    $region37: #{bert_wrapper_forward.1} parent=1 // pred_fallthru
      _
    // Predicated region
    $region38: #{bert_wrapper_forward.1} parent=1 // pred_check
      _
    $region39: #{bert_wrapper_forward.1} parent=1 // pred_check_branch
      %39 = sbr.rel (0) target = $region41
    $region40: #{bert_wrapper_forward.1} parent=1 // pred_region
      _
    $region41: #{bert_wrapper_forward.1} parent=1 // pred_fallthru
      _
    // Predicated region
    $region42: #{bert_wrapper_forward.1} parent=1 // pred_check
      _
    $region43: #{bert_wrapper_forward.1} parent=1 // pred_check_branch
      %41 = sbr.rel (0) target = $region45
    $region44: #{bert_wrapper_forward.1} parent=1 // pred_region
      _
    $region45: #{bert_wrapper_forward.1} parent=1 // pred_fallthru
      _
    // Predicated region
    $region46: #{bert_wrapper_forward.1} parent=1 // pred_check
      _
    $region47: #{bert_wrapper_forward.1} parent=1 // pred_check_branch
      %43 = sbr.rel (0) target = $region49
    $region48: #{bert_wrapper_forward.1} parent=1 // pred_region
      _
    $region49: #{bert_wrapper_forward.1} parent=1 // pred_fallthru
      _
    // Predicated region
    $region50: #{bert_wrapper_forward.1} parent=1 // pred_check
      _
    $region51: #{bert_wrapper_forward.1} parent=1 // pred_check_branch
      %45 = sbr.rel (0) target = $region53
    $region52: #{bert_wrapper_forward.1} parent=1 // pred_region
      _
    $region53: #{bert_wrapper_forward.1} parent=1 // pred_fallthru
      _
    // Predicated region
    $region54: #{bert_wrapper_forward.1} parent=1 // pred_check
      _
    $region55: #{bert_wrapper_forward.1} parent=1 // pred_check_branch
      %47 = sbr.rel (0) target = $region57
    $region56: #{bert_wrapper_forward.1} parent=1 // pred_region
      _
    $region57: #{bert_wrapper_forward.1} parent=1 // pred_fallthru
      _
    %v48 = vld [vmem:[%s2] sm:$0x3]
    %v49 = vld [vmem:[%s0] sm:$0xff]
    %v50 = vld [vmem:[%s0 + $0x8] sm:$0xff]
    %vm51 = vcmask 261120
    %v52 = vsel %vm51, %v49, 0.0
    %53 = vadd.xlane.f32.xlu0 %v52
    %v54 = vpop.xlane.xlu0 %53
    %v55 = vsel %vm51, %v50, 0.0
    %56 = vadd.xlane.f32.xlu0 %v55
    %v57 = vpop.xlane.xlu0 %56
    %v58 = vrcp.pop 32.0
    %v59 = vmul.f32 32.0, %v58
    %v60 = vsub.f32 1.0, %v59
    %v61 = vmul.f32 %v58, %v60
    %v62 = vadd.f32 %v58, %v61
    %vm63 = vweird.f32 %v58
    %v64 = vsel %vm63, %v58, %v62
    %v65 = vmul.f32 %v54, %v64
    %v66 = vmul.f32 %v57, %v64
    %v67 = vsub.f32 %v49, %v65
    %v68 = vsub.f32 %v50, %v66
    %v69 = vmul.f32 %v67, %v67
    %v70 = vmul.f32 %v68, %v68
    %v71 = vsel %vm51, %v69, 0.0
    %72 = vadd.xlane.f32.xlu0 %v71
    %v73 = vpop.xlane.xlu0 %72
    %v74 = vsel %vm51, %v70, 0.0
    %75 = vadd.xlane.f32.xlu0 %v74
    %v76 = vpop.xlane.xlu0 %75
    %v77 = vmul.f32 %v73, %v64
    %v78 = vmul.f32 %v76, %v64
    %v79 = vadd.f32 %v77, 1e-12
    %v80 = vadd.f32 %v78, 1e-12
    %v81 = vrsqrt.pop %v79
    %v82 = vmul.f32 %v81, %v79
    %v83 = vmul.f32 %v82, %v81
    %v84 = vmul.f32 0.5, %v83
    %v85 = vsub.f32 1.5, %v84
    %v86 = vmul.f32 %v81, %v85
    %vm87 = vweird.f32 %v79
    %vm88 = vweird.f32 %v81
    %vm89 = vmor %vm87, %vm88
    %v90 = vsel %vm89, %v81, %v86
    %v91 = vrsqrt.pop %v80
    %v92 = vmul.f32 %v91, %v80
    %v93 = vmul.f32 %v92, %v91
    %v94 = vmul.f32 0.5, %v93
    %v95 = vsub.f32 1.5, %v94
    %v96 = vmul.f32 %v91, %v95
    %vm97 = vweird.f32 %v80
    %vm98 = vweird.f32 %v91
    %vm99 = vmor %vm97, %vm98
    %v100 = vsel %vm99, %v91, %v96
    %v101 = vmul.f32 %v67, %v90
    %v102 = vmul.f32 %v68, %v100
    %v103 = vperm.slane %v48, 0
    %v104 = vmul.f32 %v101, %v103
    %v105 = vmul.f32 %v102, %v103
    %v106 = vperm.slane %v48, 1
    %v107 = vadd.f32 %v104, %v106
    %v108 = vadd.f32 %v105, %v106
    %v109 = vld [vmem:[%s1] sm:$0x1]
    %v110 = vld [vmem:[%s1 + $0x1] sm:$0x1]
    %v111 = vld [vmem:[%s3] sm:$0xff]
    %v112 = vld [vmem:[%s3 + $0x8] sm:$0xff]
    %v113 = vld [vmem:[%s3 + $0x10] sm:$0xff]
    %v114 = vld [vmem:[%s3 + $0x18] sm:$0xff]
    %v115 = vld [vmem:[%s4] sm:$0x1]
    %v116 = vld [vmem:[%s5] sm:$0xff]
    %v117 = vld [vmem:[%s5 + $0x8] sm:$0xff]
    %v118 = vld [vmem:[%s5 + $0x10] sm:$0xff]
    %v119 = vld [vmem:[%s5 + $0x18] sm:$0xff]
    %v120 = vld [vmem:[%s6] sm:$0xff]
    %v121 = vld [vmem:[%s6 + $0x8] sm:$0xff]
    %v122 = vld [vmem:[%s6 + $0x10] sm:$0xff]
    %v123 = vld [vmem:[%s6 + $0x18] sm:$0xff]
    %v124 = vld [vmem:[%s7] sm:$0xff]
    %v125 = vld [vmem:[%s7 + $0x8] sm:$0xff]
    %v126 = vld [vmem:[%s7 + $0x10] sm:$0xff]
    %v127 = vld [vmem:[%s7 + $0x18] sm:$0xff]
    %v128 = vld [vmem:[%s7 + $0x20] sm:$0xff]
    %v129 = vld [vmem:[%s7 + $0x28] sm:$0xff]
    %v130 = vld [vmem:[%s7 + $0x30] sm:$0xff]
    %v131 = vld [vmem:[%s7 + $0x38] sm:$0xff]
    %v132 = vld [vmem:[%s8] sm:$0x3f]
    %v133 = vld [vmem:[%s9] sm:$0x1]
    %v135 = vperm.slane %v115, 0
    %v138 = vsel %vm51, %v107, 0
    %v141 = vsel %vm51, %v108, 0
    %143 = vmatpush.msra.mxu0 0.0
    %144 = vmatpush.msra.mxu0 0.0
    %145 = vmatpush.msra.mxu0 0.0
    %146 = vmatpush.msra.mxu0 0.0
    %147 = vmatpush.msra.mxu0 0.0
    %148 = vmatpush.msra.mxu0 0.0
    %149 = vmatpush.msra.mxu0 0.0
    %150 = vmatpush.msra.mxu0 0.0
    %151 = vmatpush.msra.mxu0 0.0
    %152 = vmatpush.msra.mxu0 0.0
    %153 = vmatpush.msra.mxu0 0.0
    %154 = vmatpush.msra.mxu0 0.0
    %155 = vmatpush.msra.mxu0 %v114
    %156 = vmatpush.msra.mxu0 %v113
    %157 = vmatpush.msra.mxu0 %v112
    %158 = vmatpush.msra.mxu0 %v111
    %159 = vmatmul.f32.gmra.mxu0 %v138
    %v160 = vpop.f32.mrf.mxu0
    %v161 = vadd.f32 %v135, %v160
    %162 = vmatmul.f32.gmra.mxu0 %v141
    %v163 = vpop.f32.mrf.mxu0
    %v164 = vadd.f32 %v135, %v163
    %165 = vdwg.mxu0
    %167 = vrot.lane.b32.xlu0 %v161, 96
    %v168 = vpop.permute.xlu0 %167
    %vm169 = vcmask 130048
    %v170 = vsel %vm169, %v161, 0
    %v172 = vsel %vm169, %v168, 0
    %174 = vmatpush.xpose.msra.mxu0 0.0
    %175 = vmatpush.xpose.msra.mxu0 0.0
    %176 = vmatpush.xpose.msra.mxu0 0.0
    %177 = vmatpush.xpose.msra.mxu0 0.0
    %178 = vmatpush.xpose.msra.mxu0 0.0
    %179 = vmatpush.xpose.msra.mxu0 0.0
    %180 = vmatpush.xpose.msra.mxu0 0.0
    %181 = vmatpush.xpose.msra.mxu0 0.0
    %182 = vmatpush.xpose.msra.mxu0 0.0
    %183 = vmatpush.xpose.msra.mxu0 0.0
    %184 = vmatpush.xpose.msra.mxu0 0.0
    %185 = vmatpush.xpose.msra.mxu0 0.0
    %186 = vmatpush.xpose.msra.mxu0 0.0
    %187 = vmatpush.xpose.msra.mxu0 0.0
    %188 = vmatpush.xpose.msra.mxu0 0.0
    %189 = vmatpush.xpose.msra.mxu0 %v172
    %190 = vmatmul.f32.gmra.mxu0 %v170
    %v191 = vpop.f32.mrf.mxu0
    %v192 = vadd.f32 0.0, %v191
    %193 = vdwg.mxu0
    %195 = vrot.lane.b32.xlu0 %v164, 96
    %v196 = vpop.permute.xlu0 %195
    %v197 = vsel %vm169, %v164, 0
    %v199 = vsel %vm169, %v196, 0
    %201 = vmatpush.xpose.msra.mxu0 0.0
    %202 = vmatpush.xpose.msra.mxu0 0.0
    %203 = vmatpush.xpose.msra.mxu0 0.0
    %204 = vmatpush.xpose.msra.mxu0 0.0
    %205 = vmatpush.xpose.msra.mxu0 0.0
    %206 = vmatpush.xpose.msra.mxu0 0.0
    %207 = vmatpush.xpose.msra.mxu0 0.0
    %208 = vmatpush.xpose.msra.mxu0 0.0
    %209 = vmatpush.xpose.msra.mxu0 0.0
    %210 = vmatpush.xpose.msra.mxu0 0.0
    %211 = vmatpush.xpose.msra.mxu0 0.0
    %212 = vmatpush.xpose.msra.mxu0 0.0
    %213 = vmatpush.xpose.msra.mxu0 0.0
    %214 = vmatpush.xpose.msra.mxu0 0.0
    %215 = vmatpush.xpose.msra.mxu0 0.0
    %216 = vmatpush.xpose.msra.mxu0 %v199
    %217 = vmatmul.f32.gmra.mxu0 %v197
    %v218 = vpop.f32.mrf.mxu0
    %v219 = vadd.f32 0.0, %v218
    %220 = vdwg.mxu0
    %v221 = vmul.f32 %v192, 0.25
    %v222 = vmul.f32 %v219, 0.25
    %v225 = vperm.slane %v109, 0
    %v226 = vperm.slane %v110, 0
    %v229 = vadd.f32 %v221, %v225
    %v230 = vadd.f32 %v222, %v226
    %vm231 = vcmask 64512
    %v232 = vsel %vm231, %v229, -inf
    %233 = vmax.xlane.f32.xlu0 %v232
    %v234 = vpop.xlane.xlu0 %233
    %v235 = vsel %vm231, %v230, -inf
    %236 = vmax.xlane.f32.xlu0 %v235
    %v237 = vpop.xlane.xlu0 %236
    %v238 = vsub.f32 %v229, %v234
    %v239 = vsub.f32 %v230, %v237
    %v240 = vmul.f32 %v238, 1.442695
    %v241 = vpow.pop %v240
    %v242 = vmul.f32 %v239, 1.442695
    %v243 = vpow.pop %v242
    %v244 = vsel %vm231, %v241, 0.0
    %245 = vadd.xlane.f32.xlu0 %v244
    %v246 = vpop.xlane.xlu0 %245
    %v247 = vsel %vm231, %v243, 0.0
    %248 = vadd.xlane.f32.xlu0 %v247
    %v249 = vpop.xlane.xlu0 %248
    %v250 = vrcp.pop %v246
    %v251 = vrcp.pop %v249
    %v252 = vmul.f32 %v241, %v250
    %v253 = vmul.f32 %v243, %v251
    %254 = vrot.lane.b32.xlu0 %v161, 64
    %v255 = vpop.permute.xlu0 %254
    %v258 = vsel %vm231, %v252, 0
    %260 = vmatpush.msra.mxu0 0.0
    %261 = vmatpush.msra.mxu0 0.0
    %262 = vmatpush.msra.mxu0 0.0
    %263 = vmatpush.msra.mxu0 0.0
    %264 = vmatpush.msra.mxu0 0.0
    %265 = vmatpush.msra.mxu0 0.0
    %266 = vmatpush.msra.mxu0 0.0
    %267 = vmatpush.msra.mxu0 0.0
    %268 = vmatpush.msra.mxu0 0.0
    %269 = vmatpush.msra.mxu0 0.0
    %270 = vmatpush.msra.mxu0 0.0
    %271 = vmatpush.msra.mxu0 0.0
    %272 = vmatpush.msra.mxu0 0.0
    %273 = vmatpush.msra.mxu0 0.0
    %274 = vmatpush.msra.mxu0 0.0
    %275 = vmatpush.msra.mxu0 %v255
    %276 = vmatmul.f32.gmra.mxu0 %v258
    %v277 = vpop.f32.mrf.mxu0
    %v278 = vadd.f32 0.0, %v277
    %279 = vdwg.mxu0
    %280 = vrot.lane.b32.xlu0 %v164, 64
    %v281 = vpop.permute.xlu0 %280
    %v284 = vsel %vm231, %v253, 0
    %286 = vmatpush.msra.mxu0 0.0
    %287 = vmatpush.msra.mxu0 0.0
    %288 = vmatpush.msra.mxu0 0.0
    %289 = vmatpush.msra.mxu0 0.0
    %290 = vmatpush.msra.mxu0 0.0
    %291 = vmatpush.msra.mxu0 0.0
    %292 = vmatpush.msra.mxu0 0.0
    %293 = vmatpush.msra.mxu0 0.0
    %294 = vmatpush.msra.mxu0 0.0
    %295 = vmatpush.msra.mxu0 0.0
    %296 = vmatpush.msra.mxu0 0.0
    %297 = vmatpush.msra.mxu0 0.0
    %298 = vmatpush.msra.mxu0 0.0
    %299 = vmatpush.msra.mxu0 0.0
    %300 = vmatpush.msra.mxu0 0.0
    %301 = vmatpush.msra.mxu0 %v281
    %302 = vmatmul.f32.gmra.mxu0 %v284
    %v303 = vpop.f32.mrf.mxu0
    %v304 = vadd.f32 0.0, %v303
    %305 = vdwg.mxu0
    %306 = vrot.lane.b32.xlu0 %v161, 112
    %v307 = vpop.permute.xlu0 %306
    %308 = vrot.lane.b32.xlu0 %v161, 80
    %v309 = vpop.permute.xlu0 %308
    %v310 = vsel %vm169, %v307, 0
    %v312 = vsel %vm169, %v309, 0
    %314 = vmatpush.xpose.msra.mxu0 0.0
    %315 = vmatpush.xpose.msra.mxu0 0.0
    %316 = vmatpush.xpose.msra.mxu0 0.0
    %317 = vmatpush.xpose.msra.mxu0 0.0
    %318 = vmatpush.xpose.msra.mxu0 0.0
    %319 = vmatpush.xpose.msra.mxu0 0.0
    %320 = vmatpush.xpose.msra.mxu0 0.0
    %321 = vmatpush.xpose.msra.mxu0 0.0
    %322 = vmatpush.xpose.msra.mxu0 0.0
    %323 = vmatpush.xpose.msra.mxu0 0.0
    %324 = vmatpush.xpose.msra.mxu0 0.0
    %325 = vmatpush.xpose.msra.mxu0 0.0
    %326 = vmatpush.xpose.msra.mxu0 0.0
    %327 = vmatpush.xpose.msra.mxu0 0.0
    %328 = vmatpush.xpose.msra.mxu0 0.0
    %329 = vmatpush.xpose.msra.mxu0 %v312
    %330 = vmatmul.f32.gmra.mxu0 %v310
    %v331 = vpop.f32.mrf.mxu0
    %v332 = vadd.f32 0.0, %v331
    %333 = vdwg.mxu0
    %334 = vrot.lane.b32.xlu0 %v164, 112
    %v335 = vpop.permute.xlu0 %334
    %336 = vrot.lane.b32.xlu0 %v164, 80
    %v337 = vpop.permute.xlu0 %336
    %v338 = vsel %vm169, %v335, 0
    %v340 = vsel %vm169, %v337, 0
    %342 = vmatpush.xpose.msra.mxu0 0.0
    %343 = vmatpush.xpose.msra.mxu0 0.0
    %344 = vmatpush.xpose.msra.mxu0 0.0
    %345 = vmatpush.xpose.msra.mxu0 0.0
    %346 = vmatpush.xpose.msra.mxu0 0.0
    %347 = vmatpush.xpose.msra.mxu0 0.0
    %348 = vmatpush.xpose.msra.mxu0 0.0
    %349 = vmatpush.xpose.msra.mxu0 0.0
    %350 = vmatpush.xpose.msra.mxu0 0.0
    %351 = vmatpush.xpose.msra.mxu0 0.0
    %352 = vmatpush.xpose.msra.mxu0 0.0
    %353 = vmatpush.xpose.msra.mxu0 0.0
    %354 = vmatpush.xpose.msra.mxu0 0.0
    %355 = vmatpush.xpose.msra.mxu0 0.0
    %356 = vmatpush.xpose.msra.mxu0 0.0
    %357 = vmatpush.xpose.msra.mxu0 %v340
    %358 = vmatmul.f32.gmra.mxu0 %v338
    %v359 = vpop.f32.mrf.mxu0
    %v360 = vadd.f32 0.0, %v359
    %361 = vdwg.mxu0
    %v362 = vmul.f32 %v332, 0.25
    %v363 = vmul.f32 %v360, 0.25
    %v364 = vadd.f32 %v362, %v225
    %v365 = vadd.f32 %v363, %v226
    %v366 = vsel %vm231, %v364, -inf
    %367 = vmax.xlane.f32.xlu0 %v366
    %v368 = vpop.xlane.xlu0 %367
    %v369 = vsel %vm231, %v365, -inf
    %370 = vmax.xlane.f32.xlu0 %v369
    %v371 = vpop.xlane.xlu0 %370
    %v372 = vsub.f32 %v364, %v368
    %v373 = vsub.f32 %v365, %v371
    %v374 = vmul.f32 %v372, 1.442695
    %v375 = vpow.pop %v374
    %v376 = vmul.f32 %v373, 1.442695
    %v377 = vpow.pop %v376
    %v378 = vsel %vm231, %v375, 0.0
    %379 = vadd.xlane.f32.xlu0 %v378
    %v380 = vpop.xlane.xlu0 %379
    %v381 = vsel %vm231, %v377, 0.0
    %382 = vadd.xlane.f32.xlu0 %v381
    %v383 = vpop.xlane.xlu0 %382
    %v384 = vrcp.pop %v380
    %v385 = vrcp.pop %v383
    %v386 = vmul.f32 %v375, %v384
    %v387 = vmul.f32 %v377, %v385
    %388 = vrot.lane.b32.xlu0 %v161, 48
    %v389 = vpop.permute.xlu0 %388
    %v392 = vsel %vm231, %v386, 0
    %394 = vmatpush.msra.mxu0 0.0
    %395 = vmatpush.msra.mxu0 0.0
    %396 = vmatpush.msra.mxu0 0.0
    %397 = vmatpush.msra.mxu0 0.0
    %398 = vmatpush.msra.mxu0 0.0
    %399 = vmatpush.msra.mxu0 0.0
    %400 = vmatpush.msra.mxu0 0.0
    %401 = vmatpush.msra.mxu0 0.0
    %402 = vmatpush.msra.mxu0 0.0
    %403 = vmatpush.msra.mxu0 0.0
    %404 = vmatpush.msra.mxu0 0.0
    %405 = vmatpush.msra.mxu0 0.0
    %406 = vmatpush.msra.mxu0 0.0
    %407 = vmatpush.msra.mxu0 0.0
    %408 = vmatpush.msra.mxu0 0.0
    %409 = vmatpush.msra.mxu0 %v389
    %410 = vmatmul.f32.gmra.mxu0 %v392
    %v411 = vpop.f32.mrf.mxu0
    %v412 = vadd.f32 0.0, %v411
    %413 = vdwg.mxu0
    %414 = vrot.lane.b32.xlu0 %v164, 48
    %v415 = vpop.permute.xlu0 %414
    %v418 = vsel %vm231, %v387, 0
    %420 = vmatpush.msra.mxu0 0.0
    %421 = vmatpush.msra.mxu0 0.0
    %422 = vmatpush.msra.mxu0 0.0
    %423 = vmatpush.msra.mxu0 0.0
    %424 = vmatpush.msra.mxu0 0.0
    %425 = vmatpush.msra.mxu0 0.0
    %426 = vmatpush.msra.mxu0 0.0
    %427 = vmatpush.msra.mxu0 0.0
    %428 = vmatpush.msra.mxu0 0.0
    %429 = vmatpush.msra.mxu0 0.0
    %430 = vmatpush.msra.mxu0 0.0
    %431 = vmatpush.msra.mxu0 0.0
    %432 = vmatpush.msra.mxu0 0.0
    %433 = vmatpush.msra.mxu0 0.0
    %434 = vmatpush.msra.mxu0 0.0
    %435 = vmatpush.msra.mxu0 %v415
    %436 = vmatmul.f32.gmra.mxu0 %v418
    %v437 = vpop.f32.mrf.mxu0
    %v438 = vadd.f32 0.0, %v437
    %439 = vdwg.mxu0
    %v441 = vsel %vm169, %v412, 0
    %v444 = vsel %vm169, %v438, 0
    %446 = vmatpush.msra.mxu0 0.0
    %447 = vmatpush.msra.mxu0 0.0
    %448 = vmatpush.msra.mxu0 0.0
    %449 = vmatpush.msra.mxu0 0.0
    %450 = vmatpush.msra.mxu0 0.0
    %451 = vmatpush.msra.mxu0 0.0
    %452 = vmatpush.msra.mxu0 0.0
    %453 = vmatpush.msra.mxu0 0.0
    %454 = vmatpush.msra.mxu0 0.0
    %455 = vmatpush.msra.mxu0 0.0
    %456 = vmatpush.msra.mxu0 0.0
    %457 = vmatpush.msra.mxu0 0.0
    %458 = vmatpush.msra.mxu0 0.0
    %459 = vmatpush.msra.mxu0 0.0
    %460 = vmatpush.msra.mxu0 %v119
    %461 = vmatpush.msra.mxu0 %v118
    %462 = vmatmul.f32.gmra.mxu0 %v441
    %v463 = vpop.f32.mrf.mxu0
    %v464 = vadd.f32 0.0, %v463
    %465 = vmatmul.f32.gmra.mxu0 %v444
    %v466 = vpop.f32.mrf.mxu0
    %v467 = vadd.f32 0.0, %v466
    %468 = vdwg.mxu0
    %v470 = vsel %vm169, %v278, 0
    %v473 = vsel %vm169, %v304, 0
    %475 = vmatpush.msra.mxu0 0.0
    %476 = vmatpush.msra.mxu0 0.0
    %477 = vmatpush.msra.mxu0 0.0
    %478 = vmatpush.msra.mxu0 0.0
    %479 = vmatpush.msra.mxu0 0.0
    %480 = vmatpush.msra.mxu0 0.0
    %481 = vmatpush.msra.mxu0 0.0
    %482 = vmatpush.msra.mxu0 0.0
    %483 = vmatpush.msra.mxu0 0.0
    %484 = vmatpush.msra.mxu0 0.0
    %485 = vmatpush.msra.mxu0 0.0
    %486 = vmatpush.msra.mxu0 0.0
    %487 = vmatpush.msra.mxu0 0.0
    %488 = vmatpush.msra.mxu0 0.0
    %489 = vmatpush.msra.mxu0 %v117
    %490 = vmatpush.msra.mxu0 %v116
    %491 = vmatmul.f32.gmra.mxu0 %v470
    %v492 = vpop.f32.mrf.mxu0
    %v493 = vadd.f32 %v464, %v492
    %494 = vmatmul.f32.gmra.mxu0 %v473
    %v495 = vpop.f32.mrf.mxu0
    %v496 = vadd.f32 %v467, %v495
    %497 = vdwg.mxu0
    %v498 = vperm.slane %v132, 0
    %v499 = vadd.f32 %v493, %v498
    %v500 = vadd.f32 %v496, %v498
    %v501 = vadd.f32 %v107, %v499
    %v502 = vadd.f32 %v108, %v500
    %v503 = vsel %vm51, %v501, 0.0
    %504 = vadd.xlane.f32.xlu0 %v503
    %v505 = vpop.xlane.xlu0 %504
    %v506 = vsel %vm51, %v502, 0.0
    %507 = vadd.xlane.f32.xlu0 %v506
    %v508 = vpop.xlane.xlu0 %507
    %v509 = vmul.f32 %v505, %v64
    %v510 = vmul.f32 %v508, %v64
    %v511 = vsub.f32 %v501, %v509
    %v512 = vsub.f32 %v502, %v510
    %v513 = vmul.f32 %v511, %v511
    %v514 = vmul.f32 %v512, %v512
    %v515 = vsel %vm51, %v513, 0.0
    %516 = vadd.xlane.f32.xlu0 %v515
    %v517 = vpop.xlane.xlu0 %516
    %v518 = vsel %vm51, %v514, 0.0
    %519 = vadd.xlane.f32.xlu0 %v518
    %v520 = vpop.xlane.xlu0 %519
    %v521 = vmul.f32 %v517, %v64
    %v522 = vmul.f32 %v520, %v64
    %v523 = vadd.f32 %v521, 1e-12
    %v524 = vadd.f32 %v522, 1e-12
    %v525 = vrsqrt.pop %v523
    %v526 = vmul.f32 %v525, %v523
    %v527 = vmul.f32 %v526, %v525
    %v528 = vmul.f32 0.5, %v527
    %v529 = vsub.f32 1.5, %v528
    %v530 = vmul.f32 %v525, %v529
    %vm531 = vweird.f32 %v523
    %vm532 = vweird.f32 %v525
    %vm533 = vmor %vm531, %vm532
    %v534 = vsel %vm533, %v525, %v530
    %v535 = vrsqrt.pop %v524
    %v536 = vmul.f32 %v535, %v524
    %v537 = vmul.f32 %v536, %v535
    %v538 = vmul.f32 0.5, %v537
    %v539 = vsub.f32 1.5, %v538
    %v540 = vmul.f32 %v535, %v539
    %vm541 = vweird.f32 %v524
    %vm542 = vweird.f32 %v535
    %vm543 = vmor %vm541, %vm542
    %v544 = vsel %vm543, %v535, %v540
    %v545 = vmul.f32 %v511, %v534
    %v546 = vmul.f32 %v512, %v544
    %v547 = vperm.slane %v132, 1
    %v548 = vmul.f32 %v545, %v547
    %v549 = vmul.f32 %v546, %v547
    %v550 = vperm.slane %v132, 2
    %v551 = vadd.f32 %v548, %v550
    %v552 = vadd.f32 %v549, %v550
    %v554 = vperm.slane %v133, 0
    %v557 = vsel %vm51, %v551, 0
    %v560 = vsel %vm51, %v552, 0
    %562 = vmatpush.msra.mxu0 0.0
    %563 = vmatpush.msra.mxu0 0.0
    %564 = vmatpush.msra.mxu0 0.0
    %565 = vmatpush.msra.mxu0 0.0
    %566 = vmatpush.msra.mxu0 0.0
    %567 = vmatpush.msra.mxu0 0.0
    %568 = vmatpush.msra.mxu0 0.0
    %569 = vmatpush.msra.mxu0 0.0
    %570 = vmatpush.msra.mxu0 0.0
    %571 = vmatpush.msra.mxu0 0.0
    %572 = vmatpush.msra.mxu0 0.0
    %573 = vmatpush.msra.mxu0 0.0
    %574 = vmatpush.msra.mxu0 %v123
    %575 = vmatpush.msra.mxu0 %v122
    %576 = vmatpush.msra.mxu0 %v121
    %577 = vmatpush.msra.mxu0 %v120
    %578 = vmatmul.f32.gmra.mxu0 %v557
    %v579 = vpop.f32.mrf.mxu0
    %v580 = vadd.f32 %v554, %v579
    %581 = vmatmul.f32.gmra.mxu0 %v560
    %v582 = vpop.f32.mrf.mxu0
    %v583 = vadd.f32 %v554, %v582
    %584 = vdwg.mxu0
    %v585 = vmul.f32 %v580, 0.5
    %v586 = vmul.f32 %v583, 0.5
    %v587 = vmul.f32 %v580, 0.044715
    %v588 = vmul.f32 %v583, 0.044715
    %v589 = vmul.f32 %v587, %v580
    %v590 = vmul.f32 %v588, %v583
    %v591 = vmul.f32 %v589, %v580
    %v592 = vmul.f32 %v590, %v583
    %v593 = vadd.f32 %v580, %v591
    %v594 = vadd.f32 %v583, %v592
    %v595 = vmul.f32 %v593, 0.7978846
    %v596 = vmul.f32 %v594, 0.7978846
    %v597 = vtanh.pop %v595
    %v598 = vtanh.pop %v596
    %v599 = vadd.f32 %v597, 1.0
    %v600 = vadd.f32 %v598, 1.0
    %v601 = vmul.f32 %v585, %v599
    %v602 = vmul.f32 %v586, %v600
    %v603 = vperm.slane %v132, 3
    %vm604 = vcmask 523264
    %v606 = vsel %vm604, %v601, 0
    %v609 = vsel %vm604, %v602, 0
    %611 = vmatpush.msra.mxu0 0.0
    %612 = vmatpush.msra.mxu0 0.0
    %613 = vmatpush.msra.mxu0 0.0
    %614 = vmatpush.msra.mxu0 0.0
    %615 = vmatpush.msra.mxu0 0.0
    %616 = vmatpush.msra.mxu0 0.0
    %617 = vmatpush.msra.mxu0 0.0
    %618 = vmatpush.msra.mxu0 0.0
    %619 = vmatpush.msra.mxu0 %v131
    %620 = vmatpush.msra.mxu0 %v130
    %621 = vmatpush.msra.mxu0 %v129
    %622 = vmatpush.msra.mxu0 %v128
    %623 = vmatpush.msra.mxu0 %v127
    %624 = vmatpush.msra.mxu0 %v126
    %625 = vmatpush.msra.mxu0 %v125
    %626 = vmatpush.msra.mxu0 %v124
    %627 = vmatmul.f32.gmra.mxu0 %v606
    %v628 = vpop.f32.mrf.mxu0
    %v629 = vadd.f32 %v603, %v628
    %630 = vmatmul.f32.gmra.mxu0 %v609
    %v631 = vpop.f32.mrf.mxu0
    %v632 = vadd.f32 %v603, %v631
    %633 = vdwg.mxu0
    %v634 = vadd.f32 %v551, %v629
    %v635 = vadd.f32 %v552, %v632
    %v636 = vsel %vm51, %v634, 0.0
    %637 = vadd.xlane.f32.xlu0 %v636
    %v638 = vpop.xlane.xlu0 %637
    %v639 = vsel %vm51, %v635, 0.0
    %640 = vadd.xlane.f32.xlu0 %v639
    %v641 = vpop.xlane.xlu0 %640
    %v642 = vmul.f32 %v638, %v64
    %v643 = vmul.f32 %v641, %v64
    %v644 = vsub.f32 %v634, %v642
    %v645 = vsub.f32 %v635, %v643
    %v646 = vmul.f32 %v644, %v644
    %v647 = vmul.f32 %v645, %v645
    %v648 = vsel %vm51, %v646, 0.0
    %649 = vadd.xlane.f32.xlu0 %v648
    %v650 = vpop.xlane.xlu0 %649
    %v651 = vsel %vm51, %v647, 0.0
    %652 = vadd.xlane.f32.xlu0 %v651
    %v653 = vpop.xlane.xlu0 %652
    %v654 = vmul.f32 %v650, %v64
    %v655 = vmul.f32 %v653, %v64
    %v656 = vadd.f32 %v654, 1e-12
    %v657 = vadd.f32 %v655, 1e-12
    %v658 = vrsqrt.pop %v656
    %v659 = vmul.f32 %v658, %v656
    %v660 = vmul.f32 %v659, %v658
    %v661 = vmul.f32 0.5, %v660
    %v662 = vsub.f32 1.5, %v661
    %v663 = vmul.f32 %v658, %v662
    %vm664 = vweird.f32 %v656
    %vm665 = vweird.f32 %v658
    %vm666 = vmor %vm664, %vm665
    %v667 = vsel %vm666, %v658, %v663
    %v668 = vrsqrt.pop %v657
    %v669 = vmul.f32 %v668, %v657
    %v670 = vmul.f32 %v669, %v668
    %v671 = vmul.f32 0.5, %v670
    %v672 = vsub.f32 1.5, %v671
    %v673 = vmul.f32 %v668, %v672
    %vm674 = vweird.f32 %v657
    %vm675 = vweird.f32 %v668
    %vm676 = vmor %vm674, %vm675
    %v677 = vsel %vm676, %v668, %v673
    %v678 = vmul.f32 %v644, %v667
    %v679 = vmul.f32 %v645, %v677
    %v680 = vperm.slane %v132, 4
    %v681 = vmul.f32 %v678, %v680
    %v682 = vmul.f32 %v679, %v680
    %v683 = vperm.slane %v132, 5
    %v684 = vadd.f32 %v681, %v683
    %v685 = vadd.f32 %v682, %v683
    %s686 = scalar_lea.vmem %s3, 32
    %v687 = vld [vmem:[%s686] sm:$0xff]
    %v688 = vld [vmem:[%s686 + $0x8] sm:$0xff]
    %v689 = vld [vmem:[%s686 + $0x10] sm:$0xff]
    %v690 = vld [vmem:[%s686 + $0x18] sm:$0xff]
    %s691 = scalar_lea.vmem %s4, 1
    %v692 = vld [vmem:[%s691] sm:$0x1]
    %s693 = scalar_lea.vmem %s5, 32
    %v694 = vld [vmem:[%s693] sm:$0xff]
    %v695 = vld [vmem:[%s693 + $0x8] sm:$0xff]
    %v696 = vld [vmem:[%s693 + $0x10] sm:$0xff]
    %v697 = vld [vmem:[%s693 + $0x18] sm:$0xff]
    %s698 = scalar_lea.vmem %s6, 32
    %v699 = vld [vmem:[%s698] sm:$0xff]
    %v700 = vld [vmem:[%s698 + $0x8] sm:$0xff]
    %v701 = vld [vmem:[%s698 + $0x10] sm:$0xff]
    %v702 = vld [vmem:[%s698 + $0x18] sm:$0xff]
    %s703 = scalar_lea.vmem %s7, 64
    %v704 = vld [vmem:[%s703] sm:$0xff]
    %v705 = vld [vmem:[%s703 + $0x8] sm:$0xff]
    %v706 = vld [vmem:[%s703 + $0x10] sm:$0xff]
    %v707 = vld [vmem:[%s703 + $0x18] sm:$0xff]
    %v708 = vld [vmem:[%s703 + $0x20] sm:$0xff]
    %v709 = vld [vmem:[%s703 + $0x28] sm:$0xff]
    %v710 = vld [vmem:[%s703 + $0x30] sm:$0xff]
    %v711 = vld [vmem:[%s703 + $0x38] sm:$0xff]
    %s712 = scalar_lea.vmem %s8, 8
    %v713 = vld [vmem:[%s712] sm:$0x3f]
    %s714 = scalar_lea.vmem %s9, 1
    %v715 = vld [vmem:[%s714] sm:$0x1]
    %v717 = vperm.slane %v692, 0
    %v720 = vsel %vm51, %v684, 0
    %v723 = vsel %vm51, %v685, 0
    %725 = vmatpush.msra.mxu0 0.0
    %726 = vmatpush.msra.mxu0 0.0
    %727 = vmatpush.msra.mxu0 0.0
    %728 = vmatpush.msra.mxu0 0.0
    %729 = vmatpush.msra.mxu0 0.0
    %730 = vmatpush.msra.mxu0 0.0
    %731 = vmatpush.msra.mxu0 0.0
    %732 = vmatpush.msra.mxu0 0.0
    %733 = vmatpush.msra.mxu0 0.0
    %734 = vmatpush.msra.mxu0 0.0
    %735 = vmatpush.msra.mxu0 0.0
    %736 = vmatpush.msra.mxu0 0.0
    %737 = vmatpush.msra.mxu0 %v690
    %738 = vmatpush.msra.mxu0 %v689
    %739 = vmatpush.msra.mxu0 %v688
    %740 = vmatpush.msra.mxu0 %v687
    %741 = vmatmul.f32.gmra.mxu0 %v720
    %v742 = vpop.f32.mrf.mxu0
    %v743 = vadd.f32 %v717, %v742
    %744 = vmatmul.f32.gmra.mxu0 %v723
    %v745 = vpop.f32.mrf.mxu0
    %v746 = vadd.f32 %v717, %v745
    %747 = vdwg.mxu0
    %749 = vrot.lane.b32.xlu0 %v743, 96
    %v750 = vpop.permute.xlu0 %749
    %v751 = vsel %vm169, %v743, 0
    %v753 = vsel %vm169, %v750, 0
    %755 = vmatpush.xpose.msra.mxu0 0.0
    %756 = vmatpush.xpose.msra.mxu0 0.0
    %757 = vmatpush.xpose.msra.mxu0 0.0
    %758 = vmatpush.xpose.msra.mxu0 0.0
    %759 = vmatpush.xpose.msra.mxu0 0.0
    %760 = vmatpush.xpose.msra.mxu0 0.0
    %761 = vmatpush.xpose.msra.mxu0 0.0
    %762 = vmatpush.xpose.msra.mxu0 0.0
    %763 = vmatpush.xpose.msra.mxu0 0.0
    %764 = vmatpush.xpose.msra.mxu0 0.0
    %765 = vmatpush.xpose.msra.mxu0 0.0
    %766 = vmatpush.xpose.msra.mxu0 0.0
    %767 = vmatpush.xpose.msra.mxu0 0.0
    %768 = vmatpush.xpose.msra.mxu0 0.0
    %769 = vmatpush.xpose.msra.mxu0 0.0
    %770 = vmatpush.xpose.msra.mxu0 %v753
    %771 = vmatmul.f32.gmra.mxu0 %v751
    %v772 = vpop.f32.mrf.mxu0
    %v773 = vadd.f32 0.0, %v772
    %774 = vdwg.mxu0
    %776 = vrot.lane.b32.xlu0 %v746, 96
    %v777 = vpop.permute.xlu0 %776
    %v778 = vsel %vm169, %v746, 0
    %v780 = vsel %vm169, %v777, 0
    %782 = vmatpush.xpose.msra.mxu0 0.0
    %783 = vmatpush.xpose.msra.mxu0 0.0
    %784 = vmatpush.xpose.msra.mxu0 0.0
    %785 = vmatpush.xpose.msra.mxu0 0.0
    %786 = vmatpush.xpose.msra.mxu0 0.0
    %787 = vmatpush.xpose.msra.mxu0 0.0
    %788 = vmatpush.xpose.msra.mxu0 0.0
    %789 = vmatpush.xpose.msra.mxu0 0.0
    %790 = vmatpush.xpose.msra.mxu0 0.0
    %791 = vmatpush.xpose.msra.mxu0 0.0
    %792 = vmatpush.xpose.msra.mxu0 0.0
    %793 = vmatpush.xpose.msra.mxu0 0.0
    %794 = vmatpush.xpose.msra.mxu0 0.0
    %795 = vmatpush.xpose.msra.mxu0 0.0
    %796 = vmatpush.xpose.msra.mxu0 0.0
    %797 = vmatpush.xpose.msra.mxu0 %v780
    %798 = vmatmul.f32.gmra.mxu0 %v778
    %v799 = vpop.f32.mrf.mxu0
    %v800 = vadd.f32 0.0, %v799
    %801 = vdwg.mxu0
    %v802 = vmul.f32 %v773, 0.25
    %v803 = vmul.f32 %v800, 0.25
    %v804 = vadd.f32 %v802, %v225
    %v805 = vadd.f32 %v803, %v226
    %v806 = vsel %vm231, %v804, -inf
    %807 = vmax.xlane.f32.xlu0 %v806
    %v808 = vpop.xlane.xlu0 %807
    %v809 = vsel %vm231, %v805, -inf
    %810 = vmax.xlane.f32.xlu0 %v809
    %v811 = vpop.xlane.xlu0 %810
    %v812 = vsub.f32 %v804, %v808
    %v813 = vsub.f32 %v805, %v811
    %v814 = vmul.f32 %v812, 1.442695
    %v815 = vpow.pop %v814
    %v816 = vmul.f32 %v813, 1.442695
    %v817 = vpow.pop %v816
    %v818 = vsel %vm231, %v815, 0.0
    %819 = vadd.xlane.f32.xlu0 %v818
    %v820 = vpop.xlane.xlu0 %819
    %v821 = vsel %vm231, %v817, 0.0
    %822 = vadd.xlane.f32.xlu0 %v821
    %v823 = vpop.xlane.xlu0 %822
    %v824 = vrcp.pop %v820
    %v825 = vrcp.pop %v823
    %v826 = vmul.f32 %v815, %v824
    %v827 = vmul.f32 %v817, %v825
    %828 = vrot.lane.b32.xlu0 %v743, 64
    %v829 = vpop.permute.xlu0 %828
    %v832 = vsel %vm231, %v826, 0
    %834 = vmatpush.msra.mxu0 0.0
    %835 = vmatpush.msra.mxu0 0.0
    %836 = vmatpush.msra.mxu0 0.0
    %837 = vmatpush.msra.mxu0 0.0
    %838 = vmatpush.msra.mxu0 0.0
    %839 = vmatpush.msra.mxu0 0.0
    %840 = vmatpush.msra.mxu0 0.0
    %841 = vmatpush.msra.mxu0 0.0
    %842 = vmatpush.msra.mxu0 0.0
    %843 = vmatpush.msra.mxu0 0.0
    %844 = vmatpush.msra.mxu0 0.0
    %845 = vmatpush.msra.mxu0 0.0
    %846 = vmatpush.msra.mxu0 0.0
    %847 = vmatpush.msra.mxu0 0.0
    %848 = vmatpush.msra.mxu0 0.0
    %849 = vmatpush.msra.mxu0 %v829
    %850 = vmatmul.f32.gmra.mxu0 %v832
    %v851 = vpop.f32.mrf.mxu0
    %v852 = vadd.f32 0.0, %v851
    %853 = vdwg.mxu0
    %854 = vrot.lane.b32.xlu0 %v746, 64
    %v855 = vpop.permute.xlu0 %854
    %v858 = vsel %vm231, %v827, 0
    %860 = vmatpush.msra.mxu0 0.0
    %861 = vmatpush.msra.mxu0 0.0
    %862 = vmatpush.msra.mxu0 0.0
    %863 = vmatpush.msra.mxu0 0.0
    %864 = vmatpush.msra.mxu0 0.0
    %865 = vmatpush.msra.mxu0 0.0
    %866 = vmatpush.msra.mxu0 0.0
    %867 = vmatpush.msra.mxu0 0.0
    %868 = vmatpush.msra.mxu0 0.0
    %869 = vmatpush.msra.mxu0 0.0
    %870 = vmatpush.msra.mxu0 0.0
    %871 = vmatpush.msra.mxu0 0.0
    %872 = vmatpush.msra.mxu0 0.0
    %873 = vmatpush.msra.mxu0 0.0
    %874 = vmatpush.msra.mxu0 0.0
    %875 = vmatpush.msra.mxu0 %v855
    %876 = vmatmul.f32.gmra.mxu0 %v858
    %v877 = vpop.f32.mrf.mxu0
    %v878 = vadd.f32 0.0, %v877
    %879 = vdwg.mxu0
    %880 = vrot.lane.b32.xlu0 %v743, 112
    %v881 = vpop.permute.xlu0 %880
    %882 = vrot.lane.b32.xlu0 %v743, 80
    %v883 = vpop.permute.xlu0 %882
    %v884 = vsel %vm169, %v881, 0
    %v886 = vsel %vm169, %v883, 0
    %888 = vmatpush.xpose.msra.mxu0 0.0
    %889 = vmatpush.xpose.msra.mxu0 0.0
    %890 = vmatpush.xpose.msra.mxu0 0.0
    %891 = vmatpush.xpose.msra.mxu0 0.0
    %892 = vmatpush.xpose.msra.mxu0 0.0
    %893 = vmatpush.xpose.msra.mxu0 0.0
    %894 = vmatpush.xpose.msra.mxu0 0.0
    %895 = vmatpush.xpose.msra.mxu0 0.0
    %896 = vmatpush.xpose.msra.mxu0 0.0
    %897 = vmatpush.xpose.msra.mxu0 0.0
    %898 = vmatpush.xpose.msra.mxu0 0.0
    %899 = vmatpush.xpose.msra.mxu0 0.0
    %900 = vmatpush.xpose.msra.mxu0 0.0
    %901 = vmatpush.xpose.msra.mxu0 0.0
    %902 = vmatpush.xpose.msra.mxu0 0.0
    %903 = vmatpush.xpose.msra.mxu0 %v886
    %904 = vmatmul.f32.gmra.mxu0 %v884
    %v905 = vpop.f32.mrf.mxu0
    %v906 = vadd.f32 0.0, %v905
    %907 = vdwg.mxu0
    %908 = vrot.lane.b32.xlu0 %v746, 112
    %v909 = vpop.permute.xlu0 %908
    %910 = vrot.lane.b32.xlu0 %v746, 80
    %v911 = vpop.permute.xlu0 %910
    %v912 = vsel %vm169, %v909, 0
    %v914 = vsel %vm169, %v911, 0
    %916 = vmatpush.xpose.msra.mxu0 0.0
    %917 = vmatpush.xpose.msra.mxu0 0.0
    %918 = vmatpush.xpose.msra.mxu0 0.0
    %919 = vmatpush.xpose.msra.mxu0 0.0
    %920 = vmatpush.xpose.msra.mxu0 0.0
    %921 = vmatpush.xpose.msra.mxu0 0.0
    %922 = vmatpush.xpose.msra.mxu0 0.0
    %923 = vmatpush.xpose.msra.mxu0 0.0
    %924 = vmatpush.xpose.msra.mxu0 0.0
    %925 = vmatpush.xpose.msra.mxu0 0.0
    %926 = vmatpush.xpose.msra.mxu0 0.0
    %927 = vmatpush.xpose.msra.mxu0 0.0
    %928 = vmatpush.xpose.msra.mxu0 0.0
    %929 = vmatpush.xpose.msra.mxu0 0.0
    %930 = vmatpush.xpose.msra.mxu0 0.0
    %931 = vmatpush.xpose.msra.mxu0 %v914
    %932 = vmatmul.f32.gmra.mxu0 %v912
    %v933 = vpop.f32.mrf.mxu0
    %v934 = vadd.f32 0.0, %v933
    %935 = vdwg.mxu0
    %v936 = vmul.f32 %v906, 0.25
    %v937 = vmul.f32 %v934, 0.25
    %v938 = vadd.f32 %v936, %v225
    %v939 = vadd.f32 %v937, %v226
    %v940 = vsel %vm231, %v938, -inf
    %941 = vmax.xlane.f32.xlu0 %v940
    %v942 = vpop.xlane.xlu0 %941
    %v943 = vsel %vm231, %v939, -inf
    %944 = vmax.xlane.f32.xlu0 %v943
    %v945 = vpop.xlane.xlu0 %944
    %v946 = vsub.f32 %v938, %v942
    %v947 = vsub.f32 %v939, %v945
    %v948 = vmul.f32 %v946, 1.442695
    %v949 = vpow.pop %v948
    %v950 = vmul.f32 %v947, 1.442695
    %v951 = vpow.pop %v950
    %v952 = vsel %vm231, %v949, 0.0
    %953 = vadd.xlane.f32.xlu0 %v952
    %v954 = vpop.xlane.xlu0 %953
    %v955 = vsel %vm231, %v951, 0.0
    %956 = vadd.xlane.f32.xlu0 %v955
    %v957 = vpop.xlane.xlu0 %956
    %v958 = vrcp.pop %v954
    %v959 = vrcp.pop %v957
    %v960 = vmul.f32 %v949, %v958
    %v961 = vmul.f32 %v951, %v959
    %962 = vrot.lane.b32.xlu0 %v743, 48
    %v963 = vpop.permute.xlu0 %962
    %v966 = vsel %vm231, %v960, 0
    %968 = vmatpush.msra.mxu0 0.0
    %969 = vmatpush.msra.mxu0 0.0
    %970 = vmatpush.msra.mxu0 0.0
    %971 = vmatpush.msra.mxu0 0.0
    %972 = vmatpush.msra.mxu0 0.0
    %973 = vmatpush.msra.mxu0 0.0
    %974 = vmatpush.msra.mxu0 0.0
    %975 = vmatpush.msra.mxu0 0.0
    %976 = vmatpush.msra.mxu0 0.0
    %977 = vmatpush.msra.mxu0 0.0
    %978 = vmatpush.msra.mxu0 0.0
    %979 = vmatpush.msra.mxu0 0.0
    %980 = vmatpush.msra.mxu0 0.0
    %981 = vmatpush.msra.mxu0 0.0
    %982 = vmatpush.msra.mxu0 0.0
    %983 = vmatpush.msra.mxu0 %v963
    %984 = vmatmul.f32.gmra.mxu0 %v966
    %v985 = vpop.f32.mrf.mxu0
    %v986 = vadd.f32 0.0, %v985
    %987 = vdwg.mxu0
    %988 = vrot.lane.b32.xlu0 %v746, 48
    %v989 = vpop.permute.xlu0 %988
    %v992 = vsel %vm231, %v961, 0
    %994 = vmatpush.msra.mxu0 0.0
    %995 = vmatpush.msra.mxu0 0.0
    %996 = vmatpush.msra.mxu0 0.0
    %997 = vmatpush.msra.mxu0 0.0
    %998 = vmatpush.msra.mxu0 0.0
    %999 = vmatpush.msra.mxu0 0.0
    %1000 = vmatpush.msra.mxu0 0.0
    %1001 = vmatpush.msra.mxu0 0.0
    %1002 = vmatpush.msra.mxu0 0.0
    %1003 = vmatpush.msra.mxu0 0.0
    %1004 = vmatpush.msra.mxu0 0.0
    %1005 = vmatpush.msra.mxu0 0.0
    %1006 = vmatpush.msra.mxu0 0.0
    %1007 = vmatpush.msra.mxu0 0.0
    %1008 = vmatpush.msra.mxu0 0.0
    %1009 = vmatpush.msra.mxu0 %v989
    %1010 = vmatmul.f32.gmra.mxu0 %v992
    %v1011 = vpop.f32.mrf.mxu0
    %v1012 = vadd.f32 0.0, %v1011
    %1013 = vdwg.mxu0
    %v1015 = vsel %vm169, %v986, 0
    %v1018 = vsel %vm169, %v1012, 0
    %1020 = vmatpush.msra.mxu0 0.0
    %1021 = vmatpush.msra.mxu0 0.0
    %1022 = vmatpush.msra.mxu0 0.0
    %1023 = vmatpush.msra.mxu0 0.0
    %1024 = vmatpush.msra.mxu0 0.0
    %1025 = vmatpush.msra.mxu0 0.0
    %1026 = vmatpush.msra.mxu0 0.0
    %1027 = vmatpush.msra.mxu0 0.0
    %1028 = vmatpush.msra.mxu0 0.0
    %1029 = vmatpush.msra.mxu0 0.0
    %1030 = vmatpush.msra.mxu0 0.0
    %1031 = vmatpush.msra.mxu0 0.0
    %1032 = vmatpush.msra.mxu0 0.0
    %1033 = vmatpush.msra.mxu0 0.0
    %1034 = vmatpush.msra.mxu0 %v697
    %1035 = vmatpush.msra.mxu0 %v696
    %1036 = vmatmul.f32.gmra.mxu0 %v1015
    %v1037 = vpop.f32.mrf.mxu0
    %v1038 = vadd.f32 0.0, %v1037
    %1039 = vmatmul.f32.gmra.mxu0 %v1018
    %v1040 = vpop.f32.mrf.mxu0
    %v1041 = vadd.f32 0.0, %v1040
    %1042 = vdwg.mxu0
    %v1044 = vsel %vm169, %v852, 0
    %v1047 = vsel %vm169, %v878, 0
    %1049 = vmatpush.msra.mxu0 0.0
    %1050 = vmatpush.msra.mxu0 0.0
    %1051 = vmatpush.msra.mxu0 0.0
    %1052 = vmatpush.msra.mxu0 0.0
    %1053 = vmatpush.msra.mxu0 0.0
    %1054 = vmatpush.msra.mxu0 0.0
    %1055 = vmatpush.msra.mxu0 0.0
    %1056 = vmatpush.msra.mxu0 0.0
    %1057 = vmatpush.msra.mxu0 0.0
    %1058 = vmatpush.msra.mxu0 0.0
    %1059 = vmatpush.msra.mxu0 0.0
    %1060 = vmatpush.msra.mxu0 0.0
    %1061 = vmatpush.msra.mxu0 0.0
    %1062 = vmatpush.msra.mxu0 0.0
    %1063 = vmatpush.msra.mxu0 %v695
    %1064 = vmatpush.msra.mxu0 %v694
    %1065 = vmatmul.f32.gmra.mxu0 %v1044
    %v1066 = vpop.f32.mrf.mxu0
    %v1067 = vadd.f32 %v1038, %v1066
    %1068 = vmatmul.f32.gmra.mxu0 %v1047
    %v1069 = vpop.f32.mrf.mxu0
    %v1070 = vadd.f32 %v1041, %v1069
    %1071 = vdwg.mxu0
    %v1072 = vperm.slane %v713, 0
    %v1073 = vadd.f32 %v1067, %v1072
    %v1074 = vadd.f32 %v1070, %v1072
    %v1075 = vadd.f32 %v684, %v1073
    %v1076 = vadd.f32 %v685, %v1074
    %v1077 = vsel %vm51, %v1075, 0.0
    %1078 = vadd.xlane.f32.xlu0 %v1077
    %v1079 = vpop.xlane.xlu0 %1078
    %v1080 = vsel %vm51, %v1076, 0.0
    %1081 = vadd.xlane.f32.xlu0 %v1080
    %v1082 = vpop.xlane.xlu0 %1081
    %v1083 = vmul.f32 %v1079, %v64
    %v1084 = vmul.f32 %v1082, %v64
    %v1085 = vsub.f32 %v1075, %v1083
    %v1086 = vsub.f32 %v1076, %v1084
    %v1087 = vmul.f32 %v1085, %v1085
    %v1088 = vmul.f32 %v1086, %v1086
    %v1089 = vsel %vm51, %v1087, 0.0
    %1090 = vadd.xlane.f32.xlu0 %v1089
    %v1091 = vpop.xlane.xlu0 %1090
    %v1092 = vsel %vm51, %v1088, 0.0
    %1093 = vadd.xlane.f32.xlu0 %v1092
    %v1094 = vpop.xlane.xlu0 %1093
    %v1095 = vmul.f32 %v1091, %v64
    %v1096 = vmul.f32 %v1094, %v64
    %v1097 = vadd.f32 %v1095, 1e-12
    %v1098 = vadd.f32 %v1096, 1e-12
    %v1099 = vrsqrt.pop %v1097
    %v1100 = vmul.f32 %v1099, %v1097
    %v1101 = vmul.f32 %v1100, %v1099
    %v1102 = vmul.f32 0.5, %v1101
    %v1103 = vsub.f32 1.5, %v1102
    %v1104 = vmul.f32 %v1099, %v1103
    %vm1105 = vweird.f32 %v1097
    %vm1106 = vweird.f32 %v1099
    %vm1107 = vmor %vm1105, %vm1106
    %v1108 = vsel %vm1107, %v1099, %v1104
    %v1109 = vrsqrt.pop %v1098
    %v1110 = vmul.f32 %v1109, %v1098
    %v1111 = vmul.f32 %v1110, %v1109
    %v1112 = vmul.f32 0.5, %v1111
    %v1113 = vsub.f32 1.5, %v1112
    %v1114 = vmul.f32 %v1109, %v1113
    %vm1115 = vweird.f32 %v1098
    %vm1116 = vweird.f32 %v1109
    %vm1117 = vmor %vm1115, %vm1116
    %v1118 = vsel %vm1117, %v1109, %v1114
    %v1119 = vmul.f32 %v1085, %v1108
    %v1120 = vmul.f32 %v1086, %v1118
    %v1121 = vperm.slane %v713, 1
    %v1122 = vmul.f32 %v1119, %v1121
    %v1123 = vmul.f32 %v1120, %v1121
    %v1124 = vperm.slane %v713, 2
    %v1125 = vadd.f32 %v1122, %v1124
    %v1126 = vadd.f32 %v1123, %v1124
    %v1128 = vperm.slane %v715, 0
    %v1131 = vsel %vm51, %v1125, 0
    %v1134 = vsel %vm51, %v1126, 0
    %1136 = vmatpush.msra.mxu0 0.0
    %1137 = vmatpush.msra.mxu0 0.0
    %1138 = vmatpush.msra.mxu0 0.0
    %1139 = vmatpush.msra.mxu0 0.0
    %1140 = vmatpush.msra.mxu0 0.0
    %1141 = vmatpush.msra.mxu0 0.0
    %1142 = vmatpush.msra.mxu0 0.0
    %1143 = vmatpush.msra.mxu0 0.0
    %1144 = vmatpush.msra.mxu0 0.0
    %1145 = vmatpush.msra.mxu0 0.0
    %1146 = vmatpush.msra.mxu0 0.0
    %1147 = vmatpush.msra.mxu0 0.0
    %1148 = vmatpush.msra.mxu0 %v702
    %1149 = vmatpush.msra.mxu0 %v701
    %1150 = vmatpush.msra.mxu0 %v700
    %1151 = vmatpush.msra.mxu0 %v699
    %1152 = vmatmul.f32.gmra.mxu0 %v1131
    %v1153 = vpop.f32.mrf.mxu0
    %v1154 = vadd.f32 %v1128, %v1153
    %1155 = vmatmul.f32.gmra.mxu0 %v1134
    %v1156 = vpop.f32.mrf.mxu0
    %v1157 = vadd.f32 %v1128, %v1156
    %1158 = vdwg.mxu0
    %v1159 = vmul.f32 %v1154, 0.5
    %v1160 = vmul.f32 %v1157, 0.5
    %v1161 = vmul.f32 %v1154, 0.044715
    %v1162 = vmul.f32 %v1157, 0.044715
    %v1163 = vmul.f32 %v1161, %v1154
    %v1164 = vmul.f32 %v1162, %v1157
    %v1165 = vmul.f32 %v1163, %v1154
    %v1166 = vmul.f32 %v1164, %v1157
    %v1167 = vadd.f32 %v1154, %v1165
    %v1168 = vadd.f32 %v1157, %v1166
    %v1169 = vmul.f32 %v1167, 0.7978846
    %v1170 = vmul.f32 %v1168, 0.7978846
    %v1171 = vtanh.pop %v1169
    %v1172 = vtanh.pop %v1170
    %v1173 = vadd.f32 %v1171, 1.0
    %v1174 = vadd.f32 %v1172, 1.0
    %v1175 = vmul.f32 %v1159, %v1173
    %v1176 = vmul.f32 %v1160, %v1174
    %v1177 = vperm.slane %v713, 3
    %v1179 = vsel %vm604, %v1175, 0
    %v1182 = vsel %vm604, %v1176, 0
    %1184 = vmatpush.msra.mxu0 0.0
    %1185 = vmatpush.msra.mxu0 0.0
    %1186 = vmatpush.msra.mxu0 0.0
    %1187 = vmatpush.msra.mxu0 0.0
    %1188 = vmatpush.msra.mxu0 0.0
    %1189 = vmatpush.msra.mxu0 0.0
    %1190 = vmatpush.msra.mxu0 0.0
    %1191 = vmatpush.msra.mxu0 0.0
    %1192 = vmatpush.msra.mxu0 %v711
    %1193 = vmatpush.msra.mxu0 %v710
    %1194 = vmatpush.msra.mxu0 %v709
    %1195 = vmatpush.msra.mxu0 %v708
    %1196 = vmatpush.msra.mxu0 %v707
    %1197 = vmatpush.msra.mxu0 %v706
    %1198 = vmatpush.msra.mxu0 %v705
    %1199 = vmatpush.msra.mxu0 %v704
    %1200 = vmatmul.f32.gmra.mxu0 %v1179
    %v1201 = vpop.f32.mrf.mxu0
    %v1202 = vadd.f32 %v1177, %v1201
    %1203 = vmatmul.f32.gmra.mxu0 %v1182
    %v1204 = vpop.f32.mrf.mxu0
    %v1205 = vadd.f32 %v1177, %v1204
    %1206 = vdwg.mxu0
    %v1207 = vadd.f32 %v1125, %v1202
    %v1208 = vadd.f32 %v1126, %v1205
    %v1209 = vsel %vm51, %v1207, 0.0
    %1210 = vadd.xlane.f32.xlu0 %v1209
    %v1211 = vpop.xlane.xlu0 %1210
    %v1212 = vsel %vm51, %v1208, 0.0
    %1213 = vadd.xlane.f32.xlu0 %v1212
    %v1214 = vpop.xlane.xlu0 %1213
    %v1215 = vmul.f32 %v1211, %v64
    %v1216 = vmul.f32 %v1214, %v64
    %v1217 = vsub.f32 %v1207, %v1215
    %v1218 = vsub.f32 %v1208, %v1216
    %v1219 = vmul.f32 %v1217, %v1217
    %v1220 = vmul.f32 %v1218, %v1218
    %v1221 = vsel %vm51, %v1219, 0.0
    %1222 = vadd.xlane.f32.xlu0 %v1221
    %v1223 = vpop.xlane.xlu0 %1222
    %v1224 = vsel %vm51, %v1220, 0.0
    %1225 = vadd.xlane.f32.xlu0 %v1224
    %v1226 = vpop.xlane.xlu0 %1225
    %v1227 = vmul.f32 %v1223, %v64
    %v1228 = vmul.f32 %v1226, %v64
    %v1229 = vadd.f32 %v1227, 1e-12
    %v1230 = vadd.f32 %v1228, 1e-12
    %v1231 = vrsqrt.pop %v1229
    %v1232 = vmul.f32 %v1231, %v1229
    %v1233 = vmul.f32 %v1232, %v1231
    %v1234 = vmul.f32 0.5, %v1233
    %v1235 = vsub.f32 1.5, %v1234
    %v1236 = vmul.f32 %v1231, %v1235
    %vm1237 = vweird.f32 %v1229
    %vm1238 = vweird.f32 %v1231
    %vm1239 = vmor %vm1237, %vm1238
    %v1240 = vsel %vm1239, %v1231, %v1236
    %v1241 = vrsqrt.pop %v1230
    %v1242 = vmul.f32 %v1241, %v1230
    %v1243 = vmul.f32 %v1242, %v1241
    %v1244 = vmul.f32 0.5, %v1243
    %v1245 = vsub.f32 1.5, %v1244
    %v1246 = vmul.f32 %v1241, %v1245
    %vm1247 = vweird.f32 %v1230
    %vm1248 = vweird.f32 %v1241
    %vm1249 = vmor %vm1247, %vm1248
    %v1250 = vsel %vm1249, %v1241, %v1246
    %v1251 = vmul.f32 %v1217, %v1240
    %v1252 = vmul.f32 %v1218, %v1250
    %v1253 = vperm.slane %v713, 4
    %v1254 = vmul.f32 %v1251, %v1253
    %v1255 = vmul.f32 %v1252, %v1253
    %v1256 = vperm.slane %v713, 5
    %v1257 = vadd.f32 %v1254, %v1256
    %v1258 = vadd.f32 %v1255, %v1256
    %v1259 = vld [vmem:[%s10] sm:$0xff]
    %v1260 = vld [vmem:[%s10 + $0x8] sm:$0xff]
    %v1261 = vld [vmem:[%s10 + $0x10] sm:$0xff]
    %v1262 = vld [vmem:[%s10 + $0x18] sm:$0xff]
    %v1263 = vld [vmem:[%s11] sm:$0x1]
    %v1265 = vperm.slane %v1263, 0
    %v1269 = vrot.slane %v1258, 7
    %vm1270 = vcmask 1041409
    %v1271 = vsel %vm1270, %v1269, %v1257
    %v1272 = vsel %vm51, %v1271, 0
    %1274 = vmatpush.msra.mxu0 0.0
    %1275 = vmatpush.msra.mxu0 0.0
    %1276 = vmatpush.msra.mxu0 0.0
    %1277 = vmatpush.msra.mxu0 0.0
    %1278 = vmatpush.msra.mxu0 0.0
    %1279 = vmatpush.msra.mxu0 0.0
    %1280 = vmatpush.msra.mxu0 0.0
    %1281 = vmatpush.msra.mxu0 0.0
    %1282 = vmatpush.msra.mxu0 0.0
    %1283 = vmatpush.msra.mxu0 0.0
    %1284 = vmatpush.msra.mxu0 0.0
    %1285 = vmatpush.msra.mxu0 0.0
    %1286 = vmatpush.msra.mxu0 %v1262
    %1287 = vmatpush.msra.mxu0 %v1261
    %1288 = vmatpush.msra.mxu0 %v1260
    %1289 = vmatpush.msra.mxu0 %v1259
    %1290 = vmatmul.f32.gmra.mxu0 %v1272
    %v1291 = vpop.f32.mrf.mxu0
    %v1292 = vadd.f32 %v1265, %v1291
    %1293 = vdwg.mxu0
    %v1294 = vtanh.pop %v1292
    %v1295 = vld [vmem:[%s12] sm:$0xff]
    %v1296 = vld [vmem:[%s12 + $0x8] sm:$0xff]
    %v1297 = vld [vmem:[%s12 + $0x10] sm:$0xff]
    %v1298 = vld [vmem:[%s12 + $0x18] sm:$0xff]
    %v1299 = vld [vmem:[%s13] sm:$0x1]
    %v1301 = vperm.slane %v1299, 0
    %v1304 = vsel %vm51, %v1294, 0
    %1306 = vmatpush.msra.mxu0 0.0
    %1307 = vmatpush.msra.mxu0 0.0
    %1308 = vmatpush.msra.mxu0 0.0
    %1309 = vmatpush.msra.mxu0 0.0
    %1310 = vmatpush.msra.mxu0 0.0
    %1311 = vmatpush.msra.mxu0 0.0
    %1312 = vmatpush.msra.mxu0 0.0
    %1313 = vmatpush.msra.mxu0 0.0
    %1314 = vmatpush.msra.mxu0 0.0
    %1315 = vmatpush.msra.mxu0 0.0
    %1316 = vmatpush.msra.mxu0 0.0
    %1317 = vmatpush.msra.mxu0 0.0
    %1318 = vmatpush.msra.mxu0 %v1298
    %1319 = vmatpush.msra.mxu0 %v1297
    %1320 = vmatpush.msra.mxu0 %v1296
    %1321 = vmatpush.msra.mxu0 %v1295
    %1322 = vmatmul.f32.gmra.mxu0 %v1304
    %v1323 = vpop.f32.mrf.mxu0
    %v1324 = vadd.f32 %v1301, %v1323
    %1325 = vdwg.mxu0
    %vm1326 = vcmask 25600
    %1327 = vst.msk [vmem:[#allocation2] sm:$0x3] %vm1326, %v1324
    // Predicated region
    $region58: #{bert_wrapper_forward.1} parent=1 // pred_check
      _
    $region59: #{bert_wrapper_forward.1} parent=1 // pred_check_branch
      %1329 = sbr.rel (0) target = $region61
    $region60: #{bert_wrapper_forward.1} parent=1 // pred_region
      %1331 = vsyncadd [#allocation3], 0
      %s1333 = sshll.u32 [#allocation2], 4
      %s1334 = int_to_ptr.vmem [resolvable:$true] %s1333
      %s1335 = sshll.u32 %s14, 4
      %s1336 = int_to_ptr.hbm [resolvable:$true] %s1335
      %1338 = dma.vmem_to_hbm [thread:$0]  %s1334, 32, %s1336, [#allocation3]
    $region61: #{bert_wrapper_forward.1} parent=1 // pred_fallthru
      _
    // Predicated region
    $region62: #{bert_wrapper_forward.1} parent=1 // pred_check
      _
    $region63: #{bert_wrapper_forward.1} parent=1 // pred_check_branch
      %1340 = sbr.rel (0) target = $region65
    $region64: #{bert_wrapper_forward.1} parent=1 // pred_region
      %1342 = dma.done [#allocation3], 32
    $region65: #{bert_wrapper_forward.1} parent=1 // pred_fallthru
      _
    %1343 = vsyncpa [#allocation3], 1

</llo_original>
